<compile_context>
chip_gen: v5e
topology: v5e:2x2
jax: 0.10.0
libtpu: 0.0.40
codegen_flags: <defaults>
</compile_context>

<pallas_src>
import math

import jax
import jax.numpy as jnp
from jax import lax
from jax.experimental import pallas as pl
from jax.experimental.pallas import tpu as pltpu

INPUT_DIM = 6
INPUT_PAD = 8          # x zero-padded to 8 features (matches padded ew1 rows)
NUM_CLASSES = 2
LATENT_DIM = 32
T_DIM = 64
DEPTH = 3
HEADS = 4
HEAD_DIM = T_DIM // HEADS
FF_DIM = T_DIM * 2
EPS = 1e-5
LANE = 128

# ---- weight-slab row layout (128 lanes wide, all layer bands lane-dense) ---
#   rows 0..7      : ew1                (6,32)   stored (8,128)
#   rows 8..39     : fused enc#2->t     (32,64)
#   per layer l, base = 40 + 384*l :
#     +0   [Wq*0.25 | Wk]   (64,128)
#     +64  [Wvo_0 | Wvo_1]  (64,128)      Wvo_h = Wv_h @ Wo_h
#     +128 [Wvo_2 | Wvo_3]  (64,128)
#     +192 FFN W1           (64,128)
#     +256 FFN W2           (128,64 used)
#   rows 1192..1255: classifier W (64,2) zero-padded to (64,128)  [lane-dense out]
W_EW1 = 0
W_E2T = 8
W_LBASE = 40
W_LSTRIDE = 384
W_CLS = W_LBASE + DEPTH * W_LSTRIDE           # 1192
W_ROWS = W_CLS + T_DIM                        # 1256  (multiple of 8)

# ---- bias-slab row layout (one param per row, 128 lanes) --------------------
#   0: eb1   1: fused enc#2->t bias
#   per layer l, base = 2 + 8*l:
#     +0 [bq*0.25 | bk] (128)  +1 folded attn bias (= bo + sum_h bv_h@Wo_h)
#     +2 ln1w  +3 ln1b  +4 f1b (128)  +5 f2b  +6 ln2w  +7 ln2b
#   26: cls LN w   27: cls LN b   28: cls bias (2, zero-padded to 128)
B_LBASE = 2
B_LSTRIDE = 8
B_CLN = B_LBASE + DEPTH * B_LSTRIDE           # 26
B_CLSB = B_CLN + 2                            # 28
B_ROWS_USED = B_CLSB + 1                      # 29
B_ROWS = 32                                   # padded to a sublane multiple


# ---------------------------------------------------------------------------
# Pallas kernel: one full forward pass per grid point (one "group").
# ---------------------------------------------------------------------------
def lvt_kernel(x_ref, w_ref, b_ref, out_ref):
    def W(off, rows, cols=LANE):
        return w_ref[pl.ds(off, rows), :cols]

    def B(row, cols=LANE):
        return b_ref[pl.ds(row, 1), :cols]

    def mm(a, b):
        return jnp.dot(a, b, preferred_element_type=jnp.float32)

    def layer_norm(x, w, b):
        # E[x^2] - mu^2 form: the two XLU reductions are independent.
        mu = jnp.mean(x, axis=-1, keepdims=True)
        var = jnp.mean(x * x, axis=-1, keepdims=True) - mu * mu
        return (x - mu) * lax.rsqrt(var + EPS) * w + b

    x = x_ref[0]                                              # (S, 8)

    # encoder Linear -> ReLU, then fused (encoder Linear#2 @ latent_to_transformer)
    h = jnp.maximum(mm(x, W(W_EW1, INPUT_PAD, LATENT_DIM)) + B(0, LATENT_DIM), 0.0)
    t = mm(h, W(W_E2T, LATENT_DIM, T_DIM)) + B(1, T_DIM)      # (S, 64)

    # TransformerEncoder: post-norm layers, ReLU FFN, depth unrolled statically
    for l in range(DEPTH):
        wb = W_LBASE + l * W_LSTRIDE
        bb = B_LBASE + l * B_LSTRIDE

        # --- self-attention ---
        # one fused matmul for q|k (q already scaled by 1/sqrt(head_dim))
        qk = mm(t, W(wb + 0, T_DIM, LANE)) + B(bb + 0, LANE)          # (S,128)
        # V with out_proj pre-folded per head: vo = t @ [Wvo_0|..|Wvo_3]
        vo01 = mm(t, W(wb + 64, T_DIM, LANE))                         # (S,128)
        vo23 = mm(t, W(wb + 128, T_DIM, LANE))                        # (S,128)
        vo_bands = (vo01, vo23)

        attn = B(bb + 1, T_DIM)            # folded bias: bo + sum_h bv_h @ Wo_h
        for hh in range(HEADS):
            qh = qk[:, hh * HEAD_DIM:(hh + 1) * HEAD_DIM]
            kh = qk[:, T_DIM + hh * HEAD_DIM:T_DIM + (hh + 1) * HEAD_DIM]
            # q @ k^T without materializing a transpose
            s = lax.dot_general(qh, kh, (((1,), (1,)), ((), ())),
                                preferred_element_type=jnp.float32)
            s = s - jnp.max(s, axis=-1, keepdims=True)
            p = jnp.exp(s)
            p = p * pl.reciprocal(jnp.sum(p, axis=-1, keepdims=True), approx=False)
            vh = vo_bands[hh // 2][:, (hh % 2) * T_DIM:(hh % 2 + 1) * T_DIM]
            attn = attn + mm(p, vh)        # clean dot-accumulate chain (MRB)

        t = layer_norm(t + attn, B(bb + 2, T_DIM), B(bb + 3, T_DIM))

        # --- feed-forward ---
        ff = jnp.maximum(mm(t, W(wb + 192, T_DIM, FF_DIM)) + B(bb + 4, FF_DIM), 0.0)
        ff = mm(ff, W(wb + 256, FF_DIM, T_DIM)) + B(bb + 5, T_DIM)
        t = layer_norm(t + ff, B(bb + 6, T_DIM), B(bb + 7, T_DIM))

    # classifier: LayerNorm -> Linear (logits), lane-dense padded output store
    t = layer_norm(t, B(B_CLN, T_DIM), B(B_CLN + 1, T_DIM))
    out_ref[0] = mm(t, W(W_CLS, T_DIM, LANE)) + B(B_CLSB, LANE)


def latent_voice_transformer(x, w_slab, b_slab):
    """x: (batch, input_dim) or (groups, batch, input_dim) of independent groups."""
    squeeze = x.ndim == 2
    xg = x[None] if squeeze else x
    G, S, _ = xg.shape
    x_pad = jnp.pad(xg, ((0, 0), (0, 0), (0, INPUT_PAD - INPUT_DIM)))

    per_layer_flops = (3 * 2 * S * T_DIM * LANE            # qk, vo01, vo23
                       + HEADS * 2 * S * S * HEAD_DIM      # scores
                       + HEADS * 2 * S * S * T_DIM         # p @ v'
                       + 2 * S * T_DIM * FF_DIM + 2 * S * FF_DIM * T_DIM)
    flops = G * (2 * S * INPUT_PAD * LATENT_DIM + 2 * S * LATENT_DIM * T_DIM
                 + DEPTH * per_layer_flops + 2 * S * T_DIM * LANE)
    transcendentals = G * (DEPTH * HEADS * S * (S + 1) + 7 * S)
    bytes_accessed = 4 * (int(w_slab.size) + int(b_slab.size)
                          + int(x_pad.size) + G * S * LANE)

    out = pl.pallas_call(
        lvt_kernel,
        out_shape=jax.ShapeDtypeStruct((G, S, LANE), jnp.float32),
        grid=(G,),
        in_specs=[
            pl.BlockSpec((1, S, INPUT_PAD), lambda g: (g, 0, 0)),
            # weights/biases: constant block index -> DMA'd once, VMEM-resident
            pl.BlockSpec((W_ROWS, LANE), lambda g: (0, 0)),
            pl.BlockSpec((B_ROWS, LANE), lambda g: (0, 0)),
        ],
        out_specs=pl.BlockSpec((1, S, LANE), lambda g: (g, 0, 0)),
        compiler_params=pltpu.CompilerParams(dimension_semantics=("parallel",)),
        cost_estimate=pl.CostEstimate(flops=int(flops),
                                      transcendentals=int(transcendentals),
                                      bytes_accessed=int(bytes_accessed)),
    )(x_pad, w_slab, b_slab)

    logits = out[..., :NUM_CLASSES]
    return logits[0] if squeeze else logits


# ---------------------------------------------------------------------------
# parameter prep: raw per-layer params (PyTorch-like init) + slab packing
# ---------------------------------------------------------------------------
def init_params(key):
    def lin(k, fan_in, fan_out):
        kw, kb = jax.random.split(k)
        bound = 1.0 / math.sqrt(fan_in)
        w = jax.random.uniform(kw, (fan_in, fan_out), jnp.float32, -bound, bound)
        b = jax.random.uniform(kb, (1, fan_out), jnp.float32, -bound, bound)
        return w, b

    keys = iter(jax.random.split(key, 8 + 5 * DEPTH))

    ew1, eb1 = lin(next(keys), INPUT_DIM, LATENT_DIM)
    ew2, eb2 = lin(next(keys), LATENT_DIM, LATENT_DIM)
    ltw, ltb = lin(next(keys), LATENT_DIM, T_DIM)

    inw, inb, ow, ob = [], [], [], []
    ln1w, ln1b, f1w, f1b, f2w, f2b, ln2w, ln2b = [], [], [], [], [], [], [], []
    for _ in range(DEPTH):
        w, b = lin(next(keys), T_DIM, 3 * T_DIM)          # in_proj (q|k|v)
        inw.append(w); inb.append(b)
        w, b = lin(next(keys), T_DIM, T_DIM)              # out_proj
        ow.append(w); ob.append(b)
        w, b = lin(next(keys), T_DIM, FF_DIM)             # linear1
        f1w.append(w); f1b.append(b)
        w, b = lin(next(keys), FF_DIM, T_DIM)             # linear2
        f2w.append(w); f2b.append(b)
        _ = next(keys)
        ln1w.append(jnp.ones((1, T_DIM), jnp.float32)); ln1b.append(jnp.zeros((1, T_DIM), jnp.float32))
        ln2w.append(jnp.ones((1, T_DIM), jnp.float32)); ln2b.append(jnp.zeros((1, T_DIM), jnp.float32))

    clnw = jnp.ones((1, T_DIM), jnp.float32)
    clnb = jnp.zeros((1, T_DIM), jnp.float32)
    cw, cb = lin(next(keys), T_DIM, NUM_CLASSES)

    stack = lambda xs: jnp.stack(xs, axis=0)
    return (ew1, eb1, ew2, eb2, ltw, ltb,
            stack(inw), stack(inb), stack(ow), stack(ob),
            stack(ln1w), stack(ln1b), stack(f1w), stack(f1b),
            stack(f2w), stack(f2b), stack(ln2w), stack(ln2b),
            clnw, clnb, cw, cb)


def pack_params(params):
    """One-time host-side prep: fuse linears, fold scale & out_proj, build slabs."""
    (ew1, eb1, ew2, eb2, ltw, ltb, inw, inb, ow, ob, ln1w, ln1b,
     f1w, f1b, f2w, f2b, ln2w, ln2b, clnw, clnb, cw, cb) = params

    def pad(a, rows, cols=LANE):
        r, c = a.shape
        return jnp.pad(a, ((0, rows - r), (0, cols - c)))

    scale = 1.0 / math.sqrt(HEAD_DIM)            # 0.25 (exact power of two)
    hi = lax.Precision.HIGHEST
    cat = lambda a, b: jnp.concatenate([a, b], axis=1)

    # fuse encoder Linear#2 with latent_to_transformer (exact f32 product)
    e2t_w = jnp.dot(ew2, ltw, precision=hi)
    e2t_b = jnp.dot(eb2, ltw, precision=hi) + ltb

    wchunks = [pad(ew1, INPUT_PAD), pad(e2t_w, LATENT_DIM)]
    bchunks = [pad(eb1, 1), pad(e2t_b, 1)]
    for l in range(DEPTH):
        wq = inw[l][:, :T_DIM] * scale
        wk = inw[l][:, T_DIM:2 * T_DIM]
        wv = inw[l][:, 2 * T_DIM:]
        bq = inb[l][:, :T_DIM] * scale
        bk = inb[l][:, T_DIM:2 * T_DIM]
        bv = inb[l][:, 2 * T_DIM:]
        # fold out_proj into V per head: Wvo_h = Wv_h @ Wo_h
        wvo = [jnp.dot(wv[:, h * HEAD_DIM:(h + 1) * HEAD_DIM],
                       ow[l][h * HEAD_DIM:(h + 1) * HEAD_DIM, :], precision=hi)
               for h in range(HEADS)]
        # folded attention bias (softmax rows sum to 1): bo + sum_h bv_h @ Wo_h
        battn = ob[l] + sum(jnp.dot(bv[:, h * HEAD_DIM:(h + 1) * HEAD_DIM],
                                    ow[l][h * HEAD_DIM:(h + 1) * HEAD_DIM, :],
                                    precision=hi)
                            for h in range(HEADS))
        wchunks += [cat(wq, wk),            # (64,128) lane-dense [Wq*s | Wk]
                    cat(wvo[0], wvo[1]),    # (64,128)
                    cat(wvo[2], wvo[3]),    # (64,128)
                    f1w[l],                 # (64,128)
                    pad(f2w[l], FF_DIM)]    # (128,64) -> (128,128)
        bchunks += [cat(bq, bk), pad(battn, 1), pad(ln1w[l], 1), pad(ln1b[l], 1),
                    f1b[l], pad(f2b[l], 1), pad(ln2w[l], 1), pad(ln2b[l], 1)]
    wchunks.append(pad(cw, T_DIM))
    bchunks += [pad(clnw, 1), pad(clnb, 1), pad(cb, 1)]

    w_slab = jnp.concatenate(wchunks, axis=0)
    b_slab = jnp.concatenate(bchunks, axis=0)
    assert w_slab.shape == (W_ROWS, LANE), w_slab.shape
    assert b_slab.shape == (B_ROWS_USED, LANE), b_slab.shape
    b_slab = jnp.pad(b_slab, ((0, B_ROWS - B_ROWS_USED), (0, 0)))
    return w_slab, b_slab


# ---------------------------------------------------------------------------
# pure-JAX reference (mirrors the original PyTorch math, unfused / unfolded)
# ---------------------------------------------------------------------------
def _layer_norm_ref(x, w, b):
    mu = jnp.mean(x, axis=-1, keepdims=True)
    var = jnp.mean(jnp.square(x - mu), axis=-1, keepdims=True)
    return (x - mu) * lax.rsqrt(var + EPS) * w + b


def _ref_mha(x, in_w, in_b, out_w, out_b):
    qkv = jnp.dot(x, in_w) + in_b
    q, k, v = qkv[:, :T_DIM], qkv[:, T_DIM:2 * T_DIM], qkv[:, 2 * T_DIM:]
    scale = 1.0 / math.sqrt(HEAD_DIM)
    heads_out = []
    for h in range(HEADS):
        sl = slice(h * HEAD_DIM, (h + 1) * HEAD_DIM)
        qh, kh, vh = q[:, sl], k[:, sl], v[:, sl]
        s = jnp.dot(qh, kh.T) * scale
        s = s - jnp.max(s, axis=-1, keepdims=True)
        p = jnp.exp(s)
        p = p / jnp.sum(p, axis=-1, keepdims=True)
        heads_out.append(jnp.dot(p, vh))
    o = jnp.concatenate(heads_out, axis=-1)
    return jnp.dot(o, out_w) + out_b


def reference(x, params):
    (ew1, eb1, ew2, eb2, ltw, ltb, inw, inb, ow, ob, ln1w, ln1b,
     f1w, f1b, f2w, f2b, ln2w, ln2b, clnw, clnb, cw, cb) = params
    h = jnp.maximum(x @ ew1 + eb1, 0.0)
    latent = h @ ew2 + eb2
    t = latent @ ltw + ltb
    for l in range(DEPTH):
        a = _ref_mha(t, inw[l], inb[l], ow[l], ob[l])
        t = _layer_norm_ref(t + a, ln1w[l], ln1b[l])
        ff = jnp.maximum(t @ f1w[l] + f1b[l], 0.0)
        ff = ff @ f2w[l] + f2b[l]
        t = _layer_norm_ref(t + ff, ln2w[l], ln2b[l])
    t = _layer_norm_ref(t, clnw, clnb)
    return t @ cw + cb


if __name__ == "__main__":
    key = jax.random.PRNGKey(0)
    kx, kp, kg = jax.random.split(key, 3)
    batch = 8
    x = jax.random.normal(kx, (batch, INPUT_DIM), jnp.float32)
    params = init_params(kp)
    w_slab, b_slab = pack_params(params)

    # single forward pass (grid=(1,))
    out = jax.block_until_ready(latent_voice_transformer(x, w_slab, b_slab))
    ref = reference(x, params)
    assert out.shape == (batch, NUM_CLASSES)
    # Tolerance 2e-4 (not 1e-4): pack-time fusions (enc#2@lat2tr, Wv@Wo fold,
    # bias fold) and the E[x^2]-mu^2 LayerNorm reassociate f32 rounding; errors
    # are ~1e-6-1e-5, far below any structural-bug signal.
    assert jnp.allclose(out, ref, atol=2e-4, rtol=2e-4), (out, ref)

    # grouped path: 4 independent forward passes in one launch (parallel grid)
    groups = 4
    xg = jax.random.normal(kg, (groups, batch, INPUT_DIM), jnp.float32)
    outg = jax.block_until_ready(latent_voice_transformer(xg, w_slab, b_slab))
    refg = jax.vmap(lambda xi: reference(xi, params))(xg)
    assert outg.shape == (groups, batch, NUM_CLASSES)
    assert jnp.allclose(outg, refg, atol=2e-4, rtol=2e-4), (outg, refg)

    print("KERNEL_OK")
</pallas_src>

<mosaic_0001>
module attributes {stable_mosaic.version = 11 : i64} {
  func.func @lvt_kernel(%arg0: i32, %arg1: memref<1x8x8xf32, #tpu.memory_space<vmem>>, %arg2: memref<1256x128xf32, #tpu.memory_space<vmem>>, %arg3: memref<32x128xf32, #tpu.memory_space<vmem>>, %arg4: memref<1x8x128xf32, #tpu.memory_space<vmem>>) attributes {dimension_semantics = [#tpu.dimension_semantics<parallel>], iteration_bounds = array<i64: 1>, scalar_prefetch = 0 : i64, scratch_operands = 0 : i64, tpu.core_type = #tpu.core_type<tc>, window_params = [{transform_indices = @transform_0, window_bounds = array<i64: 1, 8, 8>}, {pipeline_mode = #tpu.pipeline_mode<synchronous>, transform_indices = @transform_1, window_bounds = array<i64: 1256, 128>}, {pipeline_mode = #tpu.pipeline_mode<synchronous>, transform_indices = @transform_2, window_bounds = array<i64: 32, 128>}, {transform_indices = @transform_3, window_bounds = array<i64: 1, 8, 128>}]} {
    %c0 = arith.constant 0 : index
    %c0_0 = arith.constant 0 : index
    %c0_1 = arith.constant 0 : index
    %0 = vector.load %arg1[%c0, %c0_0, %c0_1] : memref<1x8x8xf32, #tpu.memory_space<vmem>>, vector<1x8x8xf32>
    %1 = vector.shape_cast %0 : vector<1x8x8xf32> to vector<8x8xf32>
    %c0_2 = arith.constant 0 : index
    %c0_3 = arith.constant 0 : index
    %2 = vector.load %arg2[%c0_2, %c0_3] : memref<1256x128xf32, #tpu.memory_space<vmem>>, vector<8x32xf32>
    %cst = arith.constant dense<0.000000e+00> : vector<8x32xf32>
    %3 = tpu.matmul %1, %2, %cst {dimension_numbers = #tpu.dot_dimension_numbers<[1], [0], [0], [1], [0, 0, 1, 1], [], []>} : vector<8x8xf32>, vector<8x32xf32>, vector<8x32xf32> -> vector<8x32xf32>
    %c0_4 = arith.constant 0 : index
    %c0_5 = arith.constant 0 : index
    %4 = vector.load %arg3[%c0_4, %c0_5] : memref<32x128xf32, #tpu.memory_space<vmem>>, vector<1x32xf32>
    %5 = vector.broadcast %4 : vector<1x32xf32> to vector<8x32xf32>
    %6 = arith.addf %3, %5 : vector<8x32xf32>
    %cst_6 = arith.constant 0.000000e+00 : f32
    %7 = vector.broadcast %cst_6 : f32 to vector<8x32xf32>
    %8 = arith.maximumf %6, %7 : vector<8x32xf32>
    %c8 = arith.constant 8 : index
    %c0_7 = arith.constant 0 : index
    %9 = vector.load %arg2[%c8, %c0_7] : memref<1256x128xf32, #tpu.memory_space<vmem>>, vector<32x64xf32>
    %cst_8 = arith.constant dense<0.000000e+00> : vector<8x64xf32>
    %10 = tpu.matmul %8, %9, %cst_8 {dimension_numbers = #tpu.dot_dimension_numbers<[1], [0], [0], [1], [0, 0, 1, 1], [], []>} : vector<8x32xf32>, vector<32x64xf32>, vector<8x64xf32> -> vector<8x64xf32>
    %c1 = arith.constant 1 : index
    %c0_9 = arith.constant 0 : index
    %11 = vector.load %arg3[%c1, %c0_9] : memref<32x128xf32, #tpu.memory_space<vmem>>, vector<1x64xf32>
    %12 = vector.broadcast %11 : vector<1x64xf32> to vector<8x64xf32>
    %13 = arith.addf %10, %12 : vector<8x64xf32>
    %c40 = arith.constant 40 : index
    %c0_10 = arith.constant 0 : index
    %14 = vector.load %arg2[%c40, %c0_10] : memref<1256x128xf32, #tpu.memory_space<vmem>>, vector<64x128xf32>
    %cst_11 = arith.constant dense<0.000000e+00> : vector<8x128xf32>
    %15 = tpu.matmul %13, %14, %cst_11 {dimension_numbers = #tpu.dot_dimension_numbers<[1], [0], [0], [1], [0, 0, 1, 1], [], []>} : vector<8x64xf32>, vector<64x128xf32>, vector<8x128xf32> -> vector<8x128xf32>
    %c2 = arith.constant 2 : index
    %c0_12 = arith.constant 0 : index
    %16 = vector.load %arg3[%c2, %c0_12] : memref<32x128xf32, #tpu.memory_space<vmem>>, vector<1x128xf32>
    %17 = vector.broadcast %16 : vector<1x128xf32> to vector<8x128xf32>
    %18 = arith.addf %15, %17 : vector<8x128xf32>
    %c104 = arith.constant 104 : index
    %c0_13 = arith.constant 0 : index
    %19 = vector.load %arg2[%c104, %c0_13] : memref<1256x128xf32, #tpu.memory_space<vmem>>, vector<64x128xf32>
    %cst_14 = arith.constant dense<0.000000e+00> : vector<8x128xf32>
    %20 = tpu.matmul %13, %19, %cst_14 {dimension_numbers = #tpu.dot_dimension_numbers<[1], [0], [0], [1], [0, 0, 1, 1], [], []>} : vector<8x64xf32>, vector<64x128xf32>, vector<8x128xf32> -> vector<8x128xf32>
    %c168 = arith.constant 168 : index
    %c0_15 = arith.constant 0 : index
    %21 = vector.load %arg2[%c168, %c0_15] : memref<1256x128xf32, #tpu.memory_space<vmem>>, vector<64x128xf32>
    %cst_16 = arith.constant dense<0.000000e+00> : vector<8x128xf32>
    %22 = tpu.matmul %13, %21, %cst_16 {dimension_numbers = #tpu.dot_dimension_numbers<[1], [0], [0], [1], [0, 0, 1, 1], [], []>} : vector<8x64xf32>, vector<64x128xf32>, vector<8x128xf32> -> vector<8x128xf32>
    %c3 = arith.constant 3 : index
    %c0_17 = arith.constant 0 : index
    %23 = vector.load %arg3[%c3, %c0_17] : memref<32x128xf32, #tpu.memory_space<vmem>>, vector<1x64xf32>
    %24 = vector.extract_strided_slice %18 {offsets = [0, 0], sizes = [8, 16], strides = [1, 1]} : vector<8x128xf32> to vector<8x16xf32>
    %25 = vector.extract_strided_slice %18 {offsets = [0, 64], sizes = [8, 16], strides = [1, 1]} : vector<8x128xf32> to vector<8x16xf32>
    %cst_18 = arith.constant dense<0.000000e+00> : vector<8x8xf32>
    %26 = tpu.matmul %24, %25, %cst_18 {dimension_numbers = #tpu.dot_dimension_numbers<[1], [1], [0], [0], [0, 0, 1, 0], [], []>} : vector<8x16xf32>, vector<8x16xf32>, vector<8x8xf32> -> vector<8x8xf32>
    %cst_19 = arith.constant dense<0xFF800000> : vector<8xf32>
    %27 = vector.multi_reduction <maximumf>, %26, %cst_19 [1] : vector<8x8xf32> to vector<8xf32>
    %28 = vector.shape_cast %27 : vector<8xf32> to vector<8x1xf32>
    %29 = vector.broadcast %28 : vector<8x1xf32> to vector<8x8xf32>
    %30 = arith.subf %26, %29 : vector<8x8xf32>
    %31 = math.exp %30 : vector<8x8xf32>
    %cst_20 = arith.constant dense<0.000000e+00> : vector<8xf32>
    %32 = vector.multi_reduction <add>, %31, %cst_20 [1] : vector<8x8xf32> to vector<8xf32>
    %33 = vector.shape_cast %32 : vector<8xf32> to vector<8x1xf32>
    %34 = tpu.reciprocal %33 : vector<8x1xf32> -> vector<8x1xf32>
    %35 = vector.broadcast %34 : vector<8x1xf32> to vector<8x8xf32>
    %36 = arith.mulf %31, %35 : vector<8x8xf32>
    %37 = vector.extract_strided_slice %20 {offsets = [0, 0], sizes = [8, 64], strides = [1, 1]} : vector<8x128xf32> to vector<8x64xf32>
    %cst_21 = arith.constant dense<0.000000e+00> : vector<8x64xf32>
    %38 = tpu.matmul %36, %37, %cst_21 {dimension_numbers = #tpu.dot_dimension_numbers<[1], [0], [0], [1], [0, 0, 1, 1], [], []>} : vector<8x8xf32>, vector<8x64xf32>, vector<8x64xf32> -> vector<8x64xf32>
    %39 = vector.broadcast %23 : vector<1x64xf32> to vector<8x64xf32>
    %40 = arith.addf %39, %38 : vector<8x64xf32>
    %41 = vector.extract_strided_slice %18 {offsets = [0, 16], sizes = [8, 16], strides = [1, 1]} : vector<8x128xf32> to vector<8x16xf32>
    %42 = vector.extract_strided_slice %18 {offsets = [0, 80], sizes = [8, 16], strides = [1, 1]} : vector<8x128xf32> to vector<8x16xf32>
    %cst_22 = arith.constant dense<0.000000e+00> : vector<8x8xf32>
    %43 = tpu.matmul %41, %42, %cst_22 {dimension_numbers = #tpu.dot_dimension_numbers<[1], [1], [0], [0], [0, 0, 1, 0], [], []>} : vector<8x16xf32>, vector<8x16xf32>, vector<8x8xf32> -> vector<8x8xf32>
    %cst_23 = arith.constant dense<0xFF800000> : vector<8xf32>
    %44 = vector.multi_reduction <maximumf>, %43, %cst_23 [1] : vector<8x8xf32> to vector<8xf32>
    %45 = vector.shape_cast %44 : vector<8xf32> to vector<8x1xf32>
    %46 = vector.broadcast %45 : vector<8x1xf32> to vector<8x8xf32>
    %47 = arith.subf %43, %46 : vector<8x8xf32>
    %48 = math.exp %47 : vector<8x8xf32>
    %cst_24 = arith.constant dense<0.000000e+00> : vector<8xf32>
    %49 = vector.multi_reduction <add>, %48, %cst_24 [1] : vector<8x8xf32> to vector<8xf32>
    %50 = vector.shape_cast %49 : vector<8xf32> to vector<8x1xf32>
    %51 = tpu.reciprocal %50 : vector<8x1xf32> -> vector<8x1xf32>
    %52 = vector.broadcast %51 : vector<8x1xf32> to vector<8x8xf32>
    %53 = arith.mulf %48, %52 : vector<8x8xf32>
    %54 = vector.extract_strided_slice %20 {offsets = [0, 64], sizes = [8, 64], strides = [1, 1]} : vector<8x128xf32> to vector<8x64xf32>
    %cst_25 = arith.constant dense<0.000000e+00> : vector<8x64xf32>
    %55 = tpu.matmul %53, %54, %cst_25 {dimension_numbers = #tpu.dot_dimension_numbers<[1], [0], [0], [1], [0, 0, 1, 1], [], []>} : vector<8x8xf32>, vector<8x64xf32>, vector<8x64xf32> -> vector<8x64xf32>
    %56 = arith.addf %40, %55 : vector<8x64xf32>
    %57 = vector.extract_strided_slice %18 {offsets = [0, 32], sizes = [8, 16], strides = [1, 1]} : vector<8x128xf32> to vector<8x16xf32>
    %58 = vector.extract_strided_slice %18 {offsets = [0, 96], sizes = [8, 16], strides = [1, 1]} : vector<8x128xf32> to vector<8x16xf32>
    %cst_26 = arith.constant dense<0.000000e+00> : vector<8x8xf32>
    %59 = tpu.matmul %57, %58, %cst_26 {dimension_numbers = #tpu.dot_dimension_numbers<[1], [1], [0], [0], [0, 0, 1, 0], [], []>} : vector<8x16xf32>, vector<8x16xf32>, vector<8x8xf32> -> vector<8x8xf32>
    %cst_27 = arith.constant dense<0xFF800000> : vector<8xf32>
    %60 = vector.multi_reduction <maximumf>, %59, %cst_27 [1] : vector<8x8xf32> to vector<8xf32>
    %61 = vector.shape_cast %60 : vector<8xf32> to vector<8x1xf32>
    %62 = vector.broadcast %61 : vector<8x1xf32> to vector<8x8xf32>
    %63 = arith.subf %59, %62 : vector<8x8xf32>
    %64 = math.exp %63 : vector<8x8xf32>
    %cst_28 = arith.constant dense<0.000000e+00> : vector<8xf32>
    %65 = vector.multi_reduction <add>, %64, %cst_28 [1] : vector<8x8xf32> to vector<8xf32>
    %66 = vector.shape_cast %65 : vector<8xf32> to vector<8x1xf32>
    %67 = tpu.reciprocal %66 : vector<8x1xf32> -> vector<8x1xf32>
    %68 = vector.broadcast %67 : vector<8x1xf32> to vector<8x8xf32>
    %69 = arith.mulf %64, %68 : vector<8x8xf32>
    %70 = vector.extract_strided_slice %22 {offsets = [0, 0], sizes = [8, 64], strides = [1, 1]} : vector<8x128xf32> to vector<8x64xf32>
    %cst_29 = arith.constant dense<0.000000e+00> : vector<8x64xf32>
    %71 = tpu.matmul %69, %70, %cst_29 {dimension_numbers = #tpu.dot_dimension_numbers<[1], [0], [0], [1], [0, 0, 1, 1], [], []>} : vector<8x8xf32>, vector<8x64xf32>, vector<8x64xf32> -> vector<8x64xf32>
    %72 = arith.addf %56, %71 : vector<8x64xf32>
    %73 = vector.extract_strided_slice %18 {offsets = [0, 48], sizes = [8, 16], strides = [1, 1]} : vector<8x128xf32> to vector<8x16xf32>
    %74 = vector.extract_strided_slice %18 {offsets = [0, 112], sizes = [8, 16], strides = [1, 1]} : vector<8x128xf32> to vector<8x16xf32>
    %cst_30 = arith.constant dense<0.000000e+00> : vector<8x8xf32>
    %75 = tpu.matmul %73, %74, %cst_30 {dimension_numbers = #tpu.dot_dimension_numbers<[1], [1], [0], [0], [0, 0, 1, 0], [], []>} : vector<8x16xf32>, vector<8x16xf32>, vector<8x8xf32> -> vector<8x8xf32>
    %cst_31 = arith.constant dense<0xFF800000> : vector<8xf32>
    %76 = vector.multi_reduction <maximumf>, %75, %cst_31 [1] : vector<8x8xf32> to vector<8xf32>
    %77 = vector.shape_cast %76 : vector<8xf32> to vector<8x1xf32>
    %78 = vector.broadcast %77 : vector<8x1xf32> to vector<8x8xf32>
    %79 = arith.subf %75, %78 : vector<8x8xf32>
    %80 = math.exp %79 : vector<8x8xf32>
    %cst_32 = arith.constant dense<0.000000e+00> : vector<8xf32>
    %81 = vector.multi_reduction <add>, %80, %cst_32 [1] : vector<8x8xf32> to vector<8xf32>
    %82 = vector.shape_cast %81 : vector<8xf32> to vector<8x1xf32>
    %83 = tpu.reciprocal %82 : vector<8x1xf32> -> vector<8x1xf32>
    %84 = vector.broadcast %83 : vector<8x1xf32> to vector<8x8xf32>
    %85 = arith.mulf %80, %84 : vector<8x8xf32>
    %86 = vector.extract_strided_slice %22 {offsets = [0, 64], sizes = [8, 64], strides = [1, 1]} : vector<8x128xf32> to vector<8x64xf32>
    %cst_33 = arith.constant dense<0.000000e+00> : vector<8x64xf32>
    %87 = tpu.matmul %85, %86, %cst_33 {dimension_numbers = #tpu.dot_dimension_numbers<[1], [0], [0], [1], [0, 0, 1, 1], [], []>} : vector<8x8xf32>, vector<8x64xf32>, vector<8x64xf32> -> vector<8x64xf32>
    %88 = arith.addf %72, %87 : vector<8x64xf32>
    %89 = arith.addf %13, %88 : vector<8x64xf32>
    %c4 = arith.constant 4 : index
    %c0_34 = arith.constant 0 : index
    %90 = vector.load %arg3[%c4, %c0_34] : memref<32x128xf32, #tpu.memory_space<vmem>>, vector<1x64xf32>
    %c5 = arith.constant 5 : index
    %c0_35 = arith.constant 0 : index
    %91 = vector.load %arg3[%c5, %c0_35] : memref<32x128xf32, #tpu.memory_space<vmem>>, vector<1x64xf32>
    %cst_36 = arith.constant dense<0.000000e+00> : vector<8xf32>
    %92 = vector.multi_reduction <add>, %89, %cst_36 [1] : vector<8x64xf32> to vector<8xf32>
    %93 = vector.shape_cast %92 : vector<8xf32> to vector<8x1xf32>
    %cst_37 = arith.constant 6.400000e+01 : f32
    %94 = vector.broadcast %cst_37 : f32 to vector<8x1xf32>
    %95 = arith.divf %93, %94 : vector<8x1xf32>
    %96 = arith.mulf %89, %89 : vector<8x64xf32>
    %cst_38 = arith.constant dense<0.000000e+00> : vector<8xf32>
    %97 = vector.multi_reduction <add>, %96, %cst_38 [1] : vector<8x64xf32> to vector<8xf32>
    %98 = vector.shape_cast %97 : vector<8xf32> to vector<8x1xf32>
    %cst_39 = arith.constant 6.400000e+01 : f32
    %99 = vector.broadcast %cst_39 : f32 to vector<8x1xf32>
    %100 = arith.divf %98, %99 : vector<8x1xf32>
    %101 = arith.mulf %95, %95 : vector<8x1xf32>
    %102 = arith.subf %100, %101 : vector<8x1xf32>
    %103 = vector.broadcast %95 : vector<8x1xf32> to vector<8x64xf32>
    %104 = arith.subf %89, %103 : vector<8x64xf32>
    %cst_40 = arith.constant 9.99999974E-6 : f32
    %105 = vector.broadcast %cst_40 : f32 to vector<8x1xf32>
    %106 = arith.addf %102, %105 : vector<8x1xf32>
    %107 = math.rsqrt %106 : vector<8x1xf32>
    %108 = vector.broadcast %107 : vector<8x1xf32> to vector<8x64xf32>
    %109 = arith.mulf %104, %108 : vector<8x64xf32>
    %110 = vector.broadcast %90 : vector<1x64xf32> to vector<8x64xf32>
    %111 = arith.mulf %109, %110 : vector<8x64xf32>
    %112 = vector.broadcast %91 : vector<1x64xf32> to vector<8x64xf32>
    %113 = arith.addf %111, %112 : vector<8x64xf32>
    %c232 = arith.constant 232 : index
    %c0_41 = arith.constant 0 : index
    %114 = vector.load %arg2[%c232, %c0_41] : memref<1256x128xf32, #tpu.memory_space<vmem>>, vector<64x128xf32>
    %cst_42 = arith.constant dense<0.000000e+00> : vector<8x128xf32>
    %115 = tpu.matmul %113, %114, %cst_42 {dimension_numbers = #tpu.dot_dimension_numbers<[1], [0], [0], [1], [0, 0, 1, 1], [], []>} : vector<8x64xf32>, vector<64x128xf32>, vector<8x128xf32> -> vector<8x128xf32>
    %c6 = arith.constant 6 : index
    %c0_43 = arith.constant 0 : index
    %116 = vector.load %arg3[%c6, %c0_43] : memref<32x128xf32, #tpu.memory_space<vmem>>, vector<1x128xf32>
    %117 = vector.broadcast %116 : vector<1x128xf32> to vector<8x128xf32>
    %118 = arith.addf %115, %117 : vector<8x128xf32>
    %cst_44 = arith.constant 0.000000e+00 : f32
    %119 = vector.broadcast %cst_44 : f32 to vector<8x128xf32>
    %120 = arith.maximumf %118, %119 : vector<8x128xf32>
    %c296 = arith.constant 296 : index
    %c0_45 = arith.constant 0 : index
    %121 = vector.load %arg2[%c296, %c0_45] : memref<1256x128xf32, #tpu.memory_space<vmem>>, vector<128x64xf32>
    %cst_46 = arith.constant dense<0.000000e+00> : vector<8x64xf32>
    %122 = tpu.matmul %120, %121, %cst_46 {dimension_numbers = #tpu.dot_dimension_numbers<[1], [0], [0], [1], [0, 0, 1, 1], [], []>} : vector<8x128xf32>, vector<128x64xf32>, vector<8x64xf32> -> vector<8x64xf32>
    %c7 = arith.constant 7 : index
    %c0_47 = arith.constant 0 : index
    %123 = vector.load %arg3[%c7, %c0_47] : memref<32x128xf32, #tpu.memory_space<vmem>>, vector<1x64xf32>
    %124 = vector.broadcast %123 : vector<1x64xf32> to vector<8x64xf32>
    %125 = arith.addf %122, %124 : vector<8x64xf32>
    %126 = arith.addf %113, %125 : vector<8x64xf32>
    %c8_48 = arith.constant 8 : index
    %c0_49 = arith.constant 0 : index
    %127 = vector.load %arg3[%c8_48, %c0_49] : memref<32x128xf32, #tpu.memory_space<vmem>>, vector<1x64xf32>
    %c9 = arith.constant 9 : index
    %c0_50 = arith.constant 0 : index
    %128 = vector.load %arg3[%c9, %c0_50] : memref<32x128xf32, #tpu.memory_space<vmem>>, vector<1x64xf32>
    %cst_51 = arith.constant dense<0.000000e+00> : vector<8xf32>
    %129 = vector.multi_reduction <add>, %126, %cst_51 [1] : vector<8x64xf32> to vector<8xf32>
    %130 = vector.shape_cast %129 : vector<8xf32> to vector<8x1xf32>
    %cst_52 = arith.constant 6.400000e+01 : f32
    %131 = vector.broadcast %cst_52 : f32 to vector<8x1xf32>
    %132 = arith.divf %130, %131 : vector<8x1xf32>
    %133 = arith.mulf %126, %126 : vector<8x64xf32>
    %cst_53 = arith.constant dense<0.000000e+00> : vector<8xf32>
    %134 = vector.multi_reduction <add>, %133, %cst_53 [1] : vector<8x64xf32> to vector<8xf32>
    %135 = vector.shape_cast %134 : vector<8xf32> to vector<8x1xf32>
    %cst_54 = arith.constant 6.400000e+01 : f32
    %136 = vector.broadcast %cst_54 : f32 to vector<8x1xf32>
    %137 = arith.divf %135, %136 : vector<8x1xf32>
    %138 = arith.mulf %132, %132 : vector<8x1xf32>
    %139 = arith.subf %137, %138 : vector<8x1xf32>
    %140 = vector.broadcast %132 : vector<8x1xf32> to vector<8x64xf32>
    %141 = arith.subf %126, %140 : vector<8x64xf32>
    %cst_55 = arith.constant 9.99999974E-6 : f32
    %142 = vector.broadcast %cst_55 : f32 to vector<8x1xf32>
    %143 = arith.addf %139, %142 : vector<8x1xf32>
    %144 = math.rsqrt %143 : vector<8x1xf32>
    %145 = vector.broadcast %144 : vector<8x1xf32> to vector<8x64xf32>
    %146 = arith.mulf %141, %145 : vector<8x64xf32>
    %147 = vector.broadcast %127 : vector<1x64xf32> to vector<8x64xf32>
    %148 = arith.mulf %146, %147 : vector<8x64xf32>
    %149 = vector.broadcast %128 : vector<1x64xf32> to vector<8x64xf32>
    %150 = arith.addf %148, %149 : vector<8x64xf32>
    %c424 = arith.constant 424 : index
    %c0_56 = arith.constant 0 : index
    %151 = vector.load %arg2[%c424, %c0_56] : memref<1256x128xf32, #tpu.memory_space<vmem>>, vector<64x128xf32>
    %cst_57 = arith.constant dense<0.000000e+00> : vector<8x128xf32>
    %152 = tpu.matmul %150, %151, %cst_57 {dimension_numbers = #tpu.dot_dimension_numbers<[1], [0], [0], [1], [0, 0, 1, 1], [], []>} : vector<8x64xf32>, vector<64x128xf32>, vector<8x128xf32> -> vector<8x128xf32>
    %c10 = arith.constant 10 : index
    %c0_58 = arith.constant 0 : index
    %153 = vector.load %arg3[%c10, %c0_58] : memref<32x128xf32, #tpu.memory_space<vmem>>, vector<1x128xf32>
    %154 = vector.broadcast %153 : vector<1x128xf32> to vector<8x128xf32>
    %155 = arith.addf %152, %154 : vector<8x128xf32>
    %c488 = arith.constant 488 : index
    %c0_59 = arith.constant 0 : index
    %156 = vector.load %arg2[%c488, %c0_59] : memref<1256x128xf32, #tpu.memory_space<vmem>>, vector<64x128xf32>
    %cst_60 = arith.constant dense<0.000000e+00> : vector<8x128xf32>
    %157 = tpu.matmul %150, %156, %cst_60 {dimension_numbers = #tpu.dot_dimension_numbers<[1], [0], [0], [1], [0, 0, 1, 1], [], []>} : vector<8x64xf32>, vector<64x128xf32>, vector<8x128xf32> -> vector<8x128xf32>
    %c552 = arith.constant 552 : index
    %c0_61 = arith.constant 0 : index
    %158 = vector.load %arg2[%c552, %c0_61] : memref<1256x128xf32, #tpu.memory_space<vmem>>, vector<64x128xf32>
    %cst_62 = arith.constant dense<0.000000e+00> : vector<8x128xf32>
    %159 = tpu.matmul %150, %158, %cst_62 {dimension_numbers = #tpu.dot_dimension_numbers<[1], [0], [0], [1], [0, 0, 1, 1], [], []>} : vector<8x64xf32>, vector<64x128xf32>, vector<8x128xf32> -> vector<8x128xf32>
    %c11 = arith.constant 11 : index
    %c0_63 = arith.constant 0 : index
    %160 = vector.load %arg3[%c11, %c0_63] : memref<32x128xf32, #tpu.memory_space<vmem>>, vector<1x64xf32>
    %161 = vector.extract_strided_slice %155 {offsets = [0, 0], sizes = [8, 16], strides = [1, 1]} : vector<8x128xf32> to vector<8x16xf32>
    %162 = vector.extract_strided_slice %155 {offsets = [0, 64], sizes = [8, 16], strides = [1, 1]} : vector<8x128xf32> to vector<8x16xf32>
    %cst_64 = arith.constant dense<0.000000e+00> : vector<8x8xf32>
    %163 = tpu.matmul %161, %162, %cst_64 {dimension_numbers = #tpu.dot_dimension_numbers<[1], [1], [0], [0], [0, 0, 1, 0], [], []>} : vector<8x16xf32>, vector<8x16xf32>, vector<8x8xf32> -> vector<8x8xf32>
    %cst_65 = arith.constant dense<0xFF800000> : vector<8xf32>
    %164 = vector.multi_reduction <maximumf>, %163, %cst_65 [1] : vector<8x8xf32> to vector<8xf32>
    %165 = vector.shape_cast %164 : vector<8xf32> to vector<8x1xf32>
    %166 = vector.broadcast %165 : vector<8x1xf32> to vector<8x8xf32>
    %167 = arith.subf %163, %166 : vector<8x8xf32>
    %168 = math.exp %167 : vector<8x8xf32>
    %cst_66 = arith.constant dense<0.000000e+00> : vector<8xf32>
    %169 = vector.multi_reduction <add>, %168, %cst_66 [1] : vector<8x8xf32> to vector<8xf32>
    %170 = vector.shape_cast %169 : vector<8xf32> to vector<8x1xf32>
    %171 = tpu.reciprocal %170 : vector<8x1xf32> -> vector<8x1xf32>
    %172 = vector.broadcast %171 : vector<8x1xf32> to vector<8x8xf32>
    %173 = arith.mulf %168, %172 : vector<8x8xf32>
    %174 = vector.extract_strided_slice %157 {offsets = [0, 0], sizes = [8, 64], strides = [1, 1]} : vector<8x128xf32> to vector<8x64xf32>
    %cst_67 = arith.constant dense<0.000000e+00> : vector<8x64xf32>
    %175 = tpu.matmul %173, %174, %cst_67 {dimension_numbers = #tpu.dot_dimension_numbers<[1], [0], [0], [1], [0, 0, 1, 1], [], []>} : vector<8x8xf32>, vector<8x64xf32>, vector<8x64xf32> -> vector<8x64xf32>
    %176 = vector.broadcast %160 : vector<1x64xf32> to vector<8x64xf32>
    %177 = arith.addf %176, %175 : vector<8x64xf32>
    %178 = vector.extract_strided_slice %155 {offsets = [0, 16], sizes = [8, 16], strides = [1, 1]} : vector<8x128xf32> to vector<8x16xf32>
    %179 = vector.extract_strided_slice %155 {offsets = [0, 80], sizes = [8, 16], strides = [1, 1]} : vector<8x128xf32> to vector<8x16xf32>
    %cst_68 = arith.constant dense<0.000000e+00> : vector<8x8xf32>
    %180 = tpu.matmul %178, %179, %cst_68 {dimension_numbers = #tpu.dot_dimension_numbers<[1], [1], [0], [0], [0, 0, 1, 0], [], []>} : vector<8x16xf32>, vector<8x16xf32>, vector<8x8xf32> -> vector<8x8xf32>
    %cst_69 = arith.constant dense<0xFF800000> : vector<8xf32>
    %181 = vector.multi_reduction <maximumf>, %180, %cst_69 [1] : vector<8x8xf32> to vector<8xf32>
    %182 = vector.shape_cast %181 : vector<8xf32> to vector<8x1xf32>
    %183 = vector.broadcast %182 : vector<8x1xf32> to vector<8x8xf32>
    %184 = arith.subf %180, %183 : vector<8x8xf32>
    %185 = math.exp %184 : vector<8x8xf32>
    %cst_70 = arith.constant dense<0.000000e+00> : vector<8xf32>
    %186 = vector.multi_reduction <add>, %185, %cst_70 [1] : vector<8x8xf32> to vector<8xf32>
    %187 = vector.shape_cast %186 : vector<8xf32> to vector<8x1xf32>
    %188 = tpu.reciprocal %187 : vector<8x1xf32> -> vector<8x1xf32>
    %189 = vector.broadcast %188 : vector<8x1xf32> to vector<8x8xf32>
    %190 = arith.mulf %185, %189 : vector<8x8xf32>
    %191 = vector.extract_strided_slice %157 {offsets = [0, 64], sizes = [8, 64], strides = [1, 1]} : vector<8x128xf32> to vector<8x64xf32>
    %cst_71 = arith.constant dense<0.000000e+00> : vector<8x64xf32>
    %192 = tpu.matmul %190, %191, %cst_71 {dimension_numbers = #tpu.dot_dimension_numbers<[1], [0], [0], [1], [0, 0, 1, 1], [], []>} : vector<8x8xf32>, vector<8x64xf32>, vector<8x64xf32> -> vector<8x64xf32>
    %193 = arith.addf %177, %192 : vector<8x64xf32>
    %194 = vector.extract_strided_slice %155 {offsets = [0, 32], sizes = [8, 16], strides = [1, 1]} : vector<8x128xf32> to vector<8x16xf32>
    %195 = vector.extract_strided_slice %155 {offsets = [0, 96], sizes = [8, 16], strides = [1, 1]} : vector<8x128xf32> to vector<8x16xf32>
    %cst_72 = arith.constant dense<0.000000e+00> : vector<8x8xf32>
    %196 = tpu.matmul %194, %195, %cst_72 {dimension_numbers = #tpu.dot_dimension_numbers<[1], [1], [0], [0], [0, 0, 1, 0], [], []>} : vector<8x16xf32>, vector<8x16xf32>, vector<8x8xf32> -> vector<8x8xf32>
    %cst_73 = arith.constant dense<0xFF800000> : vector<8xf32>
    %197 = vector.multi_reduction <maximumf>, %196, %cst_73 [1] : vector<8x8xf32> to vector<8xf32>
    %198 = vector.shape_cast %197 : vector<8xf32> to vector<8x1xf32>
    %199 = vector.broadcast %198 : vector<8x1xf32> to vector<8x8xf32>
    %200 = arith.subf %196, %199 : vector<8x8xf32>
    %201 = math.exp %200 : vector<8x8xf32>
    %cst_74 = arith.constant dense<0.000000e+00> : vector<8xf32>
    %202 = vector.multi_reduction <add>, %201, %cst_74 [1] : vector<8x8xf32> to vector<8xf32>
    %203 = vector.shape_cast %202 : vector<8xf32> to vector<8x1xf32>
    %204 = tpu.reciprocal %203 : vector<8x1xf32> -> vector<8x1xf32>
    %205 = vector.broadcast %204 : vector<8x1xf32> to vector<8x8xf32>
    %206 = arith.mulf %201, %205 : vector<8x8xf32>
    %207 = vector.extract_strided_slice %159 {offsets = [0, 0], sizes = [8, 64], strides = [1, 1]} : vector<8x128xf32> to vector<8x64xf32>
    %cst_75 = arith.constant dense<0.000000e+00> : vector<8x64xf32>
    %208 = tpu.matmul %206, %207, %cst_75 {dimension_numbers = #tpu.dot_dimension_numbers<[1], [0], [0], [1], [0, 0, 1, 1], [], []>} : vector<8x8xf32>, vector<8x64xf32>, vector<8x64xf32> -> vector<8x64xf32>
    %209 = arith.addf %193, %208 : vector<8x64xf32>
    %210 = vector.extract_strided_slice %155 {offsets = [0, 48], sizes = [8, 16], strides = [1, 1]} : vector<8x128xf32> to vector<8x16xf32>
    %211 = vector.extract_strided_slice %155 {offsets = [0, 112], sizes = [8, 16], strides = [1, 1]} : vector<8x128xf32> to vector<8x16xf32>
    %cst_76 = arith.constant dense<0.000000e+00> : vector<8x8xf32>
    %212 = tpu.matmul %210, %211, %cst_76 {dimension_numbers = #tpu.dot_dimension_numbers<[1], [1], [0], [0], [0, 0, 1, 0], [], []>} : vector<8x16xf32>, vector<8x16xf32>, vector<8x8xf32> -> vector<8x8xf32>
    %cst_77 = arith.constant dense<0xFF800000> : vector<8xf32>
    %213 = vector.multi_reduction <maximumf>, %212, %cst_77 [1] : vector<8x8xf32> to vector<8xf32>
    %214 = vector.shape_cast %213 : vector<8xf32> to vector<8x1xf32>
    %215 = vector.broadcast %214 : vector<8x1xf32> to vector<8x8xf32>
    %216 = arith.subf %212, %215 : vector<8x8xf32>
    %217 = math.exp %216 : vector<8x8xf32>
    %cst_78 = arith.constant dense<0.000000e+00> : vector<8xf32>
    %218 = vector.multi_reduction <add>, %217, %cst_78 [1] : vector<8x8xf32> to vector<8xf32>
    %219 = vector.shape_cast %218 : vector<8xf32> to vector<8x1xf32>
    %220 = tpu.reciprocal %219 : vector<8x1xf32> -> vector<8x1xf32>
    %221 = vector.broadcast %220 : vector<8x1xf32> to vector<8x8xf32>
    %222 = arith.mulf %217, %221 : vector<8x8xf32>
    %223 = vector.extract_strided_slice %159 {offsets = [0, 64], sizes = [8, 64], strides = [1, 1]} : vector<8x128xf32> to vector<8x64xf32>
    %cst_79 = arith.constant dense<0.000000e+00> : vector<8x64xf32>
    %224 = tpu.matmul %222, %223, %cst_79 {dimension_numbers = #tpu.dot_dimension_numbers<[1], [0], [0], [1], [0, 0, 1, 1], [], []>} : vector<8x8xf32>, vector<8x64xf32>, vector<8x64xf32> -> vector<8x64xf32>
    %225 = arith.addf %209, %224 : vector<8x64xf32>
    %226 = arith.addf %150, %225 : vector<8x64xf32>
    %c12 = arith.constant 12 : index
    %c0_80 = arith.constant 0 : index
    %227 = vector.load %arg3[%c12, %c0_80] : memref<32x128xf32, #tpu.memory_space<vmem>>, vector<1x64xf32>
    %c13 = arith.constant 13 : index
    %c0_81 = arith.constant 0 : index
    %228 = vector.load %arg3[%c13, %c0_81] : memref<32x128xf32, #tpu.memory_space<vmem>>, vector<1x64xf32>
    %cst_82 = arith.constant dense<0.000000e+00> : vector<8xf32>
    %229 = vector.multi_reduction <add>, %226, %cst_82 [1] : vector<8x64xf32> to vector<8xf32>
    %230 = vector.shape_cast %229 : vector<8xf32> to vector<8x1xf32>
    %cst_83 = arith.constant 6.400000e+01 : f32
    %231 = vector.broadcast %cst_83 : f32 to vector<8x1xf32>
    %232 = arith.divf %230, %231 : vector<8x1xf32>
    %233 = arith.mulf %226, %226 : vector<8x64xf32>
    %cst_84 = arith.constant dense<0.000000e+00> : vector<8xf32>
    %234 = vector.multi_reduction <add>, %233, %cst_84 [1] : vector<8x64xf32> to vector<8xf32>
    %235 = vector.shape_cast %234 : vector<8xf32> to vector<8x1xf32>
    %cst_85 = arith.constant 6.400000e+01 : f32
    %236 = vector.broadcast %cst_85 : f32 to vector<8x1xf32>
    %237 = arith.divf %235, %236 : vector<8x1xf32>
    %238 = arith.mulf %232, %232 : vector<8x1xf32>
    %239 = arith.subf %237, %238 : vector<8x1xf32>
    %240 = vector.broadcast %232 : vector<8x1xf32> to vector<8x64xf32>
    %241 = arith.subf %226, %240 : vector<8x64xf32>
    %cst_86 = arith.constant 9.99999974E-6 : f32
    %242 = vector.broadcast %cst_86 : f32 to vector<8x1xf32>
    %243 = arith.addf %239, %242 : vector<8x1xf32>
    %244 = math.rsqrt %243 : vector<8x1xf32>
    %245 = vector.broadcast %244 : vector<8x1xf32> to vector<8x64xf32>
    %246 = arith.mulf %241, %245 : vector<8x64xf32>
    %247 = vector.broadcast %227 : vector<1x64xf32> to vector<8x64xf32>
    %248 = arith.mulf %246, %247 : vector<8x64xf32>
    %249 = vector.broadcast %228 : vector<1x64xf32> to vector<8x64xf32>
    %250 = arith.addf %248, %249 : vector<8x64xf32>
    %c616 = arith.constant 616 : index
    %c0_87 = arith.constant 0 : index
    %251 = vector.load %arg2[%c616, %c0_87] : memref<1256x128xf32, #tpu.memory_space<vmem>>, vector<64x128xf32>
    %cst_88 = arith.constant dense<0.000000e+00> : vector<8x128xf32>
    %252 = tpu.matmul %250, %251, %cst_88 {dimension_numbers = #tpu.dot_dimension_numbers<[1], [0], [0], [1], [0, 0, 1, 1], [], []>} : vector<8x64xf32>, vector<64x128xf32>, vector<8x128xf32> -> vector<8x128xf32>
    %c14 = arith.constant 14 : index
    %c0_89 = arith.constant 0 : index
    %253 = vector.load %arg3[%c14, %c0_89] : memref<32x128xf32, #tpu.memory_space<vmem>>, vector<1x128xf32>
    %254 = vector.broadcast %253 : vector<1x128xf32> to vector<8x128xf32>
    %255 = arith.addf %252, %254 : vector<8x128xf32>
    %cst_90 = arith.constant 0.000000e+00 : f32
    %256 = vector.broadcast %cst_90 : f32 to vector<8x128xf32>
    %257 = arith.maximumf %255, %256 : vector<8x128xf32>
    %c680 = arith.constant 680 : index
    %c0_91 = arith.constant 0 : index
    %258 = vector.load %arg2[%c680, %c0_91] : memref<1256x128xf32, #tpu.memory_space<vmem>>, vector<128x64xf32>
    %cst_92 = arith.constant dense<0.000000e+00> : vector<8x64xf32>
    %259 = tpu.matmul %257, %258, %cst_92 {dimension_numbers = #tpu.dot_dimension_numbers<[1], [0], [0], [1], [0, 0, 1, 1], [], []>} : vector<8x128xf32>, vector<128x64xf32>, vector<8x64xf32> -> vector<8x64xf32>
    %c15 = arith.constant 15 : index
    %c0_93 = arith.constant 0 : index
    %260 = vector.load %arg3[%c15, %c0_93] : memref<32x128xf32, #tpu.memory_space<vmem>>, vector<1x64xf32>
    %261 = vector.broadcast %260 : vector<1x64xf32> to vector<8x64xf32>
    %262 = arith.addf %259, %261 : vector<8x64xf32>
    %263 = arith.addf %250, %262 : vector<8x64xf32>
    %c16 = arith.constant 16 : index
    %c0_94 = arith.constant 0 : index
    %264 = vector.load %arg3[%c16, %c0_94] : memref<32x128xf32, #tpu.memory_space<vmem>>, vector<1x64xf32>
    %c17 = arith.constant 17 : index
    %c0_95 = arith.constant 0 : index
    %265 = vector.load %arg3[%c17, %c0_95] : memref<32x128xf32, #tpu.memory_space<vmem>>, vector<1x64xf32>
    %cst_96 = arith.constant dense<0.000000e+00> : vector<8xf32>
    %266 = vector.multi_reduction <add>, %263, %cst_96 [1] : vector<8x64xf32> to vector<8xf32>
    %267 = vector.shape_cast %266 : vector<8xf32> to vector<8x1xf32>
    %cst_97 = arith.constant 6.400000e+01 : f32
    %268 = vector.broadcast %cst_97 : f32 to vector<8x1xf32>
    %269 = arith.divf %267, %268 : vector<8x1xf32>
    %270 = arith.mulf %263, %263 : vector<8x64xf32>
    %cst_98 = arith.constant dense<0.000000e+00> : vector<8xf32>
    %271 = vector.multi_reduction <add>, %270, %cst_98 [1] : vector<8x64xf32> to vector<8xf32>
    %272 = vector.shape_cast %271 : vector<8xf32> to vector<8x1xf32>
    %cst_99 = arith.constant 6.400000e+01 : f32
    %273 = vector.broadcast %cst_99 : f32 to vector<8x1xf32>
    %274 = arith.divf %272, %273 : vector<8x1xf32>
    %275 = arith.mulf %269, %269 : vector<8x1xf32>
    %276 = arith.subf %274, %275 : vector<8x1xf32>
    %277 = vector.broadcast %269 : vector<8x1xf32> to vector<8x64xf32>
    %278 = arith.subf %263, %277 : vector<8x64xf32>
    %cst_100 = arith.constant 9.99999974E-6 : f32
    %279 = vector.broadcast %cst_100 : f32 to vector<8x1xf32>
    %280 = arith.addf %276, %279 : vector<8x1xf32>
    %281 = math.rsqrt %280 : vector<8x1xf32>
    %282 = vector.broadcast %281 : vector<8x1xf32> to vector<8x64xf32>
    %283 = arith.mulf %278, %282 : vector<8x64xf32>
    %284 = vector.broadcast %264 : vector<1x64xf32> to vector<8x64xf32>
    %285 = arith.mulf %283, %284 : vector<8x64xf32>
    %286 = vector.broadcast %265 : vector<1x64xf32> to vector<8x64xf32>
    %287 = arith.addf %285, %286 : vector<8x64xf32>
    %c808 = arith.constant 808 : index
    %c0_101 = arith.constant 0 : index
    %288 = vector.load %arg2[%c808, %c0_101] : memref<1256x128xf32, #tpu.memory_space<vmem>>, vector<64x128xf32>
    %cst_102 = arith.constant dense<0.000000e+00> : vector<8x128xf32>
    %289 = tpu.matmul %287, %288, %cst_102 {dimension_numbers = #tpu.dot_dimension_numbers<[1], [0], [0], [1], [0, 0, 1, 1], [], []>} : vector<8x64xf32>, vector<64x128xf32>, vector<8x128xf32> -> vector<8x128xf32>
    %c18 = arith.constant 18 : index
    %c0_103 = arith.constant 0 : index
    %290 = vector.load %arg3[%c18, %c0_103] : memref<32x128xf32, #tpu.memory_space<vmem>>, vector<1x128xf32>
    %291 = vector.broadcast %290 : vector<1x128xf32> to vector<8x128xf32>
    %292 = arith.addf %289, %291 : vector<8x128xf32>
    %c872 = arith.constant 872 : index
    %c0_104 = arith.constant 0 : index
    %293 = vector.load %arg2[%c872, %c0_104] : memref<1256x128xf32, #tpu.memory_space<vmem>>, vector<64x128xf32>
    %cst_105 = arith.constant dense<0.000000e+00> : vector<8x128xf32>
    %294 = tpu.matmul %287, %293, %cst_105 {dimension_numbers = #tpu.dot_dimension_numbers<[1], [0], [0], [1], [0, 0, 1, 1], [], []>} : vector<8x64xf32>, vector<64x128xf32>, vector<8x128xf32> -> vector<8x128xf32>
    %c936 = arith.constant 936 : index
    %c0_106 = arith.constant 0 : index
    %295 = vector.load %arg2[%c936, %c0_106] : memref<1256x128xf32, #tpu.memory_space<vmem>>, vector<64x128xf32>
    %cst_107 = arith.constant dense<0.000000e+00> : vector<8x128xf32>
    %296 = tpu.matmul %287, %295, %cst_107 {dimension_numbers = #tpu.dot_dimension_numbers<[1], [0], [0], [1], [0, 0, 1, 1], [], []>} : vector<8x64xf32>, vector<64x128xf32>, vector<8x128xf32> -> vector<8x128xf32>
    %c19 = arith.constant 19 : index
    %c0_108 = arith.constant 0 : index
    %297 = vector.load %arg3[%c19, %c0_108] : memref<32x128xf32, #tpu.memory_space<vmem>>, vector<1x64xf32>
    %298 = vector.extract_strided_slice %292 {offsets = [0, 0], sizes = [8, 16], strides = [1, 1]} : vector<8x128xf32> to vector<8x16xf32>
    %299 = vector.extract_strided_slice %292 {offsets = [0, 64], sizes = [8, 16], strides = [1, 1]} : vector<8x128xf32> to vector<8x16xf32>
    %cst_109 = arith.constant dense<0.000000e+00> : vector<8x8xf32>
    %300 = tpu.matmul %298, %299, %cst_109 {dimension_numbers = #tpu.dot_dimension_numbers<[1], [1], [0], [0], [0, 0, 1, 0], [], []>} : vector<8x16xf32>, vector<8x16xf32>, vector<8x8xf32> -> vector<8x8xf32>
    %cst_110 = arith.constant dense<0xFF800000> : vector<8xf32>
    %301 = vector.multi_reduction <maximumf>, %300, %cst_110 [1] : vector<8x8xf32> to vector<8xf32>
    %302 = vector.shape_cast %301 : vector<8xf32> to vector<8x1xf32>
    %303 = vector.broadcast %302 : vector<8x1xf32> to vector<8x8xf32>
    %304 = arith.subf %300, %303 : vector<8x8xf32>
    %305 = math.exp %304 : vector<8x8xf32>
    %cst_111 = arith.constant dense<0.000000e+00> : vector<8xf32>
    %306 = vector.multi_reduction <add>, %305, %cst_111 [1] : vector<8x8xf32> to vector<8xf32>
    %307 = vector.shape_cast %306 : vector<8xf32> to vector<8x1xf32>
    %308 = tpu.reciprocal %307 : vector<8x1xf32> -> vector<8x1xf32>
    %309 = vector.broadcast %308 : vector<8x1xf32> to vector<8x8xf32>
    %310 = arith.mulf %305, %309 : vector<8x8xf32>
    %311 = vector.extract_strided_slice %294 {offsets = [0, 0], sizes = [8, 64], strides = [1, 1]} : vector<8x128xf32> to vector<8x64xf32>
    %cst_112 = arith.constant dense<0.000000e+00> : vector<8x64xf32>
    %312 = tpu.matmul %310, %311, %cst_112 {dimension_numbers = #tpu.dot_dimension_numbers<[1], [0], [0], [1], [0, 0, 1, 1], [], []>} : vector<8x8xf32>, vector<8x64xf32>, vector<8x64xf32> -> vector<8x64xf32>
    %313 = vector.broadcast %297 : vector<1x64xf32> to vector<8x64xf32>
    %314 = arith.addf %313, %312 : vector<8x64xf32>
    %315 = vector.extract_strided_slice %292 {offsets = [0, 16], sizes = [8, 16], strides = [1, 1]} : vector<8x128xf32> to vector<8x16xf32>
    %316 = vector.extract_strided_slice %292 {offsets = [0, 80], sizes = [8, 16], strides = [1, 1]} : vector<8x128xf32> to vector<8x16xf32>
    %cst_113 = arith.constant dense<0.000000e+00> : vector<8x8xf32>
    %317 = tpu.matmul %315, %316, %cst_113 {dimension_numbers = #tpu.dot_dimension_numbers<[1], [1], [0], [0], [0, 0, 1, 0], [], []>} : vector<8x16xf32>, vector<8x16xf32>, vector<8x8xf32> -> vector<8x8xf32>
    %cst_114 = arith.constant dense<0xFF800000> : vector<8xf32>
    %318 = vector.multi_reduction <maximumf>, %317, %cst_114 [1] : vector<8x8xf32> to vector<8xf32>
    %319 = vector.shape_cast %318 : vector<8xf32> to vector<8x1xf32>
    %320 = vector.broadcast %319 : vector<8x1xf32> to vector<8x8xf32>
    %321 = arith.subf %317, %320 : vector<8x8xf32>
    %322 = math.exp %321 : vector<8x8xf32>
    %cst_115 = arith.constant dense<0.000000e+00> : vector<8xf32>
    %323 = vector.multi_reduction <add>, %322, %cst_115 [1] : vector<8x8xf32> to vector<8xf32>
    %324 = vector.shape_cast %323 : vector<8xf32> to vector<8x1xf32>
    %325 = tpu.reciprocal %324 : vector<8x1xf32> -> vector<8x1xf32>
    %326 = vector.broadcast %325 : vector<8x1xf32> to vector<8x8xf32>
    %327 = arith.mulf %322, %326 : vector<8x8xf32>
    %328 = vector.extract_strided_slice %294 {offsets = [0, 64], sizes = [8, 64], strides = [1, 1]} : vector<8x128xf32> to vector<8x64xf32>
    %cst_116 = arith.constant dense<0.000000e+00> : vector<8x64xf32>
    %329 = tpu.matmul %327, %328, %cst_116 {dimension_numbers = #tpu.dot_dimension_numbers<[1], [0], [0], [1], [0, 0, 1, 1], [], []>} : vector<8x8xf32>, vector<8x64xf32>, vector<8x64xf32> -> vector<8x64xf32>
    %330 = arith.addf %314, %329 : vector<8x64xf32>
    %331 = vector.extract_strided_slice %292 {offsets = [0, 32], sizes = [8, 16], strides = [1, 1]} : vector<8x128xf32> to vector<8x16xf32>
    %332 = vector.extract_strided_slice %292 {offsets = [0, 96], sizes = [8, 16], strides = [1, 1]} : vector<8x128xf32> to vector<8x16xf32>
    %cst_117 = arith.constant dense<0.000000e+00> : vector<8x8xf32>
    %333 = tpu.matmul %331, %332, %cst_117 {dimension_numbers = #tpu.dot_dimension_numbers<[1], [1], [0], [0], [0, 0, 1, 0], [], []>} : vector<8x16xf32>, vector<8x16xf32>, vector<8x8xf32> -> vector<8x8xf32>
    %cst_118 = arith.constant dense<0xFF800000> : vector<8xf32>
    %334 = vector.multi_reduction <maximumf>, %333, %cst_118 [1] : vector<8x8xf32> to vector<8xf32>
    %335 = vector.shape_cast %334 : vector<8xf32> to vector<8x1xf32>
    %336 = vector.broadcast %335 : vector<8x1xf32> to vector<8x8xf32>
    %337 = arith.subf %333, %336 : vector<8x8xf32>
    %338 = math.exp %337 : vector<8x8xf32>
    %cst_119 = arith.constant dense<0.000000e+00> : vector<8xf32>
    %339 = vector.multi_reduction <add>, %338, %cst_119 [1] : vector<8x8xf32> to vector<8xf32>
    %340 = vector.shape_cast %339 : vector<8xf32> to vector<8x1xf32>
    %341 = tpu.reciprocal %340 : vector<8x1xf32> -> vector<8x1xf32>
    %342 = vector.broadcast %341 : vector<8x1xf32> to vector<8x8xf32>
    %343 = arith.mulf %338, %342 : vector<8x8xf32>
    %344 = vector.extract_strided_slice %296 {offsets = [0, 0], sizes = [8, 64], strides = [1, 1]} : vector<8x128xf32> to vector<8x64xf32>
    %cst_120 = arith.constant dense<0.000000e+00> : vector<8x64xf32>
    %345 = tpu.matmul %343, %344, %cst_120 {dimension_numbers = #tpu.dot_dimension_numbers<[1], [0], [0], [1], [0, 0, 1, 1], [], []>} : vector<8x8xf32>, vector<8x64xf32>, vector<8x64xf32> -> vector<8x64xf32>
    %346 = arith.addf %330, %345 : vector<8x64xf32>
    %347 = vector.extract_strided_slice %292 {offsets = [0, 48], sizes = [8, 16], strides = [1, 1]} : vector<8x128xf32> to vector<8x16xf32>
    %348 = vector.extract_strided_slice %292 {offsets = [0, 112], sizes = [8, 16], strides = [1, 1]} : vector<8x128xf32> to vector<8x16xf32>
    %cst_121 = arith.constant dense<0.000000e+00> : vector<8x8xf32>
    %349 = tpu.matmul %347, %348, %cst_121 {dimension_numbers = #tpu.dot_dimension_numbers<[1], [1], [0], [0], [0, 0, 1, 0], [], []>} : vector<8x16xf32>, vector<8x16xf32>, vector<8x8xf32> -> vector<8x8xf32>
    %cst_122 = arith.constant dense<0xFF800000> : vector<8xf32>
    %350 = vector.multi_reduction <maximumf>, %349, %cst_122 [1] : vector<8x8xf32> to vector<8xf32>
    %351 = vector.shape_cast %350 : vector<8xf32> to vector<8x1xf32>
    %352 = vector.broadcast %351 : vector<8x1xf32> to vector<8x8xf32>
    %353 = arith.subf %349, %352 : vector<8x8xf32>
    %354 = math.exp %353 : vector<8x8xf32>
    %cst_123 = arith.constant dense<0.000000e+00> : vector<8xf32>
    %355 = vector.multi_reduction <add>, %354, %cst_123 [1] : vector<8x8xf32> to vector<8xf32>
    %356 = vector.shape_cast %355 : vector<8xf32> to vector<8x1xf32>
    %357 = tpu.reciprocal %356 : vector<8x1xf32> -> vector<8x1xf32>
    %358 = vector.broadcast %357 : vector<8x1xf32> to vector<8x8xf32>
    %359 = arith.mulf %354, %358 : vector<8x8xf32>
    %360 = vector.extract_strided_slice %296 {offsets = [0, 64], sizes = [8, 64], strides = [1, 1]} : vector<8x128xf32> to vector<8x64xf32>
    %cst_124 = arith.constant dense<0.000000e+00> : vector<8x64xf32>
    %361 = tpu.matmul %359, %360, %cst_124 {dimension_numbers = #tpu.dot_dimension_numbers<[1], [0], [0], [1], [0, 0, 1, 1], [], []>} : vector<8x8xf32>, vector<8x64xf32>, vector<8x64xf32> -> vector<8x64xf32>
    %362 = arith.addf %346, %361 : vector<8x64xf32>
    %363 = arith.addf %287, %362 : vector<8x64xf32>
    %c20 = arith.constant 20 : index
    %c0_125 = arith.constant 0 : index
    %364 = vector.load %arg3[%c20, %c0_125] : memref<32x128xf32, #tpu.memory_space<vmem>>, vector<1x64xf32>
    %c21 = arith.constant 21 : index
    %c0_126 = arith.constant 0 : index
    %365 = vector.load %arg3[%c21, %c0_126] : memref<32x128xf32, #tpu.memory_space<vmem>>, vector<1x64xf32>
    %cst_127 = arith.constant dense<0.000000e+00> : vector<8xf32>
    %366 = vector.multi_reduction <add>, %363, %cst_127 [1] : vector<8x64xf32> to vector<8xf32>
    %367 = vector.shape_cast %366 : vector<8xf32> to vector<8x1xf32>
    %cst_128 = arith.constant 6.400000e+01 : f32
    %368 = vector.broadcast %cst_128 : f32 to vector<8x1xf32>
    %369 = arith.divf %367, %368 : vector<8x1xf32>
    %370 = arith.mulf %363, %363 : vector<8x64xf32>
    %cst_129 = arith.constant dense<0.000000e+00> : vector<8xf32>
    %371 = vector.multi_reduction <add>, %370, %cst_129 [1] : vector<8x64xf32> to vector<8xf32>
    %372 = vector.shape_cast %371 : vector<8xf32> to vector<8x1xf32>
    %cst_130 = arith.constant 6.400000e+01 : f32
    %373 = vector.broadcast %cst_130 : f32 to vector<8x1xf32>
    %374 = arith.divf %372, %373 : vector<8x1xf32>
    %375 = arith.mulf %369, %369 : vector<8x1xf32>
    %376 = arith.subf %374, %375 : vector<8x1xf32>
    %377 = vector.broadcast %369 : vector<8x1xf32> to vector<8x64xf32>
    %378 = arith.subf %363, %377 : vector<8x64xf32>
    %cst_131 = arith.constant 9.99999974E-6 : f32
    %379 = vector.broadcast %cst_131 : f32 to vector<8x1xf32>
    %380 = arith.addf %376, %379 : vector<8x1xf32>
    %381 = math.rsqrt %380 : vector<8x1xf32>
    %382 = vector.broadcast %381 : vector<8x1xf32> to vector<8x64xf32>
    %383 = arith.mulf %378, %382 : vector<8x64xf32>
    %384 = vector.broadcast %364 : vector<1x64xf32> to vector<8x64xf32>
    %385 = arith.mulf %383, %384 : vector<8x64xf32>
    %386 = vector.broadcast %365 : vector<1x64xf32> to vector<8x64xf32>
    %387 = arith.addf %385, %386 : vector<8x64xf32>
    %c1000 = arith.constant 1000 : index
    %c0_132 = arith.constant 0 : index
    %388 = vector.load %arg2[%c1000, %c0_132] : memref<1256x128xf32, #tpu.memory_space<vmem>>, vector<64x128xf32>
    %cst_133 = arith.constant dense<0.000000e+00> : vector<8x128xf32>
    %389 = tpu.matmul %387, %388, %cst_133 {dimension_numbers = #tpu.dot_dimension_numbers<[1], [0], [0], [1], [0, 0, 1, 1], [], []>} : vector<8x64xf32>, vector<64x128xf32>, vector<8x128xf32> -> vector<8x128xf32>
    %c22 = arith.constant 22 : index
    %c0_134 = arith.constant 0 : index
    %390 = vector.load %arg3[%c22, %c0_134] : memref<32x128xf32, #tpu.memory_space<vmem>>, vector<1x128xf32>
    %391 = vector.broadcast %390 : vector<1x128xf32> to vector<8x128xf32>
    %392 = arith.addf %389, %391 : vector<8x128xf32>
    %cst_135 = arith.constant 0.000000e+00 : f32
    %393 = vector.broadcast %cst_135 : f32 to vector<8x128xf32>
    %394 = arith.maximumf %392, %393 : vector<8x128xf32>
    %c1064 = arith.constant 1064 : index
    %c0_136 = arith.constant 0 : index
    %395 = vector.load %arg2[%c1064, %c0_136] : memref<1256x128xf32, #tpu.memory_space<vmem>>, vector<128x64xf32>
    %cst_137 = arith.constant dense<0.000000e+00> : vector<8x64xf32>
    %396 = tpu.matmul %394, %395, %cst_137 {dimension_numbers = #tpu.dot_dimension_numbers<[1], [0], [0], [1], [0, 0, 1, 1], [], []>} : vector<8x128xf32>, vector<128x64xf32>, vector<8x64xf32> -> vector<8x64xf32>
    %c23 = arith.constant 23 : index
    %c0_138 = arith.constant 0 : index
    %397 = vector.load %arg3[%c23, %c0_138] : memref<32x128xf32, #tpu.memory_space<vmem>>, vector<1x64xf32>
    %398 = vector.broadcast %397 : vector<1x64xf32> to vector<8x64xf32>
    %399 = arith.addf %396, %398 : vector<8x64xf32>
    %400 = arith.addf %387, %399 : vector<8x64xf32>
    %c24 = arith.constant 24 : index
    %c0_139 = arith.constant 0 : index
    %401 = vector.load %arg3[%c24, %c0_139] : memref<32x128xf32, #tpu.memory_space<vmem>>, vector<1x64xf32>
    %c25 = arith.constant 25 : index
    %c0_140 = arith.constant 0 : index
    %402 = vector.load %arg3[%c25, %c0_140] : memref<32x128xf32, #tpu.memory_space<vmem>>, vector<1x64xf32>
    %cst_141 = arith.constant dense<0.000000e+00> : vector<8xf32>
    %403 = vector.multi_reduction <add>, %400, %cst_141 [1] : vector<8x64xf32> to vector<8xf32>
    %404 = vector.shape_cast %403 : vector<8xf32> to vector<8x1xf32>
    %cst_142 = arith.constant 6.400000e+01 : f32
    %405 = vector.broadcast %cst_142 : f32 to vector<8x1xf32>
    %406 = arith.divf %404, %405 : vector<8x1xf32>
    %407 = arith.mulf %400, %400 : vector<8x64xf32>
    %cst_143 = arith.constant dense<0.000000e+00> : vector<8xf32>
    %408 = vector.multi_reduction <add>, %407, %cst_143 [1] : vector<8x64xf32> to vector<8xf32>
    %409 = vector.shape_cast %408 : vector<8xf32> to vector<8x1xf32>
    %cst_144 = arith.constant 6.400000e+01 : f32
    %410 = vector.broadcast %cst_144 : f32 to vector<8x1xf32>
    %411 = arith.divf %409, %410 : vector<8x1xf32>
    %412 = arith.mulf %406, %406 : vector<8x1xf32>
    %413 = arith.subf %411, %412 : vector<8x1xf32>
    %414 = vector.broadcast %406 : vector<8x1xf32> to vector<8x64xf32>
    %415 = arith.subf %400, %414 : vector<8x64xf32>
    %cst_145 = arith.constant 9.99999974E-6 : f32
    %416 = vector.broadcast %cst_145 : f32 to vector<8x1xf32>
    %417 = arith.addf %413, %416 : vector<8x1xf32>
    %418 = math.rsqrt %417 : vector<8x1xf32>
    %419 = vector.broadcast %418 : vector<8x1xf32> to vector<8x64xf32>
    %420 = arith.mulf %415, %419 : vector<8x64xf32>
    %421 = vector.broadcast %401 : vector<1x64xf32> to vector<8x64xf32>
    %422 = arith.mulf %420, %421 : vector<8x64xf32>
    %423 = vector.broadcast %402 : vector<1x64xf32> to vector<8x64xf32>
    %424 = arith.addf %422, %423 : vector<8x64xf32>
    %c26 = arith.constant 26 : index
    %c0_146 = arith.constant 0 : index
    %425 = vector.load %arg3[%c26, %c0_146] : memref<32x128xf32, #tpu.memory_space<vmem>>, vector<1x64xf32>
    %c27 = arith.constant 27 : index
    %c0_147 = arith.constant 0 : index
    %426 = vector.load %arg3[%c27, %c0_147] : memref<32x128xf32, #tpu.memory_space<vmem>>, vector<1x64xf32>
    %cst_148 = arith.constant dense<0.000000e+00> : vector<8xf32>
    %427 = vector.multi_reduction <add>, %424, %cst_148 [1] : vector<8x64xf32> to vector<8xf32>
    %428 = vector.shape_cast %427 : vector<8xf32> to vector<8x1xf32>
    %cst_149 = arith.constant 6.400000e+01 : f32
    %429 = vector.broadcast %cst_149 : f32 to vector<8x1xf32>
    %430 = arith.divf %428, %429 : vector<8x1xf32>
    %431 = arith.mulf %424, %424 : vector<8x64xf32>
    %cst_150 = arith.constant dense<0.000000e+00> : vector<8xf32>
    %432 = vector.multi_reduction <add>, %431, %cst_150 [1] : vector<8x64xf32> to vector<8xf32>
    %433 = vector.shape_cast %432 : vector<8xf32> to vector<8x1xf32>
    %cst_151 = arith.constant 6.400000e+01 : f32
    %434 = vector.broadcast %cst_151 : f32 to vector<8x1xf32>
    %435 = arith.divf %433, %434 : vector<8x1xf32>
    %436 = arith.mulf %430, %430 : vector<8x1xf32>
    %437 = arith.subf %435, %436 : vector<8x1xf32>
    %438 = vector.broadcast %430 : vector<8x1xf32> to vector<8x64xf32>
    %439 = arith.subf %424, %438 : vector<8x64xf32>
    %cst_152 = arith.constant 9.99999974E-6 : f32
    %440 = vector.broadcast %cst_152 : f32 to vector<8x1xf32>
    %441 = arith.addf %437, %440 : vector<8x1xf32>
    %442 = math.rsqrt %441 : vector<8x1xf32>
    %443 = vector.broadcast %442 : vector<8x1xf32> to vector<8x64xf32>
    %444 = arith.mulf %439, %443 : vector<8x64xf32>
    %445 = vector.broadcast %425 : vector<1x64xf32> to vector<8x64xf32>
    %446 = arith.mulf %444, %445 : vector<8x64xf32>
    %447 = vector.broadcast %426 : vector<1x64xf32> to vector<8x64xf32>
    %448 = arith.addf %446, %447 : vector<8x64xf32>
    %c1192 = arith.constant 1192 : index
    %c0_153 = arith.constant 0 : index
    %449 = vector.load %arg2[%c1192, %c0_153] : memref<1256x128xf32, #tpu.memory_space<vmem>>, vector<64x128xf32>
    %cst_154 = arith.constant dense<0.000000e+00> : vector<8x128xf32>
    %450 = tpu.matmul %448, %449, %cst_154 {dimension_numbers = #tpu.dot_dimension_numbers<[1], [0], [0], [1], [0, 0, 1, 1], [], []>} : vector<8x64xf32>, vector<64x128xf32>, vector<8x128xf32> -> vector<8x128xf32>
    %c28 = arith.constant 28 : index
    %c0_155 = arith.constant 0 : index
    %451 = vector.load %arg3[%c28, %c0_155] : memref<32x128xf32, #tpu.memory_space<vmem>>, vector<1x128xf32>
    %452 = vector.broadcast %451 : vector<1x128xf32> to vector<8x128xf32>
    %453 = arith.addf %450, %452 : vector<8x128xf32>
    %c0_156 = arith.constant 0 : index
    %c0_157 = arith.constant 0 : index
    %c0_158 = arith.constant 0 : index
    %454 = vector.load %arg4[%c0_156, %c0_157, %c0_158] : memref<1x8x128xf32, #tpu.memory_space<vmem>>, vector<1x8x128xf32>
    %455 = vector.shape_cast %454 : vector<1x8x128xf32> to vector<8x128xf32>
    %456 = vector.shape_cast %453 : vector<8x128xf32> to vector<1x8x128xf32>
    tpu.vector_store %arg4[%c0_156, %c0_157, %c0_158], %456 {strides = array<i32>} : memref<1x8x128xf32, #tpu.memory_space<vmem>>, vector<1x8x128xf32>,
    return
  }
  func.func @transform_0(%arg0: i32) -> (i32, i32, i32) {
    %c0_i32 = arith.constant 0 : i32
    %c0_i32_0 = arith.constant 0 : i32
    %c0_i32_1 = arith.constant 0 : i32
    return %arg0, %c0_i32, %c0_i32_0 : i32, i32, i32
  }
  func.func @transform_1(%arg0: i32) -> (i32, i32) {
    %c0_i32 = arith.constant 0 : i32
    %c0_i32_0 = arith.constant 0 : i32
    %c0_i32_1 = arith.constant 0 : i32
    return %c0_i32, %c0_i32_0 : i32, i32
  }
  func.func @transform_2(%arg0: i32) -> (i32, i32) {
    %c0_i32 = arith.constant 0 : i32
    %c0_i32_0 = arith.constant 0 : i32
    %c0_i32_1 = arith.constant 0 : i32
    return %c0_i32, %c0_i32_0 : i32, i32
  }
  func.func @transform_3(%arg0: i32) -> (i32, i32, i32) {
    %c0_i32 = arith.constant 0 : i32
    %c0_i32_0 = arith.constant 0 : i32
    %c0_i32_1 = arith.constant 0 : i32
    return %arg0, %c0_i32, %c0_i32_0 : i32, i32, i32
  }
}

</mosaic_0001>

<llo_original>
// kernel: tpu_custom_call.1
$region0: #{tpu_custom_call.1}
  #allocation0 [shape = 'u32[]', space=smem, size = 0x4, offset = 0x4, fixed_abs, tag = 'smem constant byte address 0x4 - core index']
  #allocation1 [shape = 'u32[72,128]{1,0:T(1,128)}', space=vmem, size = 0x9000, scoped, tag = 'internal scratch']
  %s0 = inlined_call_operand.hbm [shape: f32[1,8,8], index: 0, kind: input, shape index: {}]
  %s1 = inlined_call_operand.hbm [shape: f32[1256,128], index: 1, kind: input, shape index: {}]
  %s2 = inlined_call_operand.hbm [shape: f32[32,128], index: 2, kind: input, shape index: {}]
  %s3 = inlined_call_operand.hbm [shape: f32[1,8,128], index: 3, kind: output, shape index: {}]
  %s4 = sld [smem:[#allocation0]]
  $region34: #{tpu_custom_call.1} parent=0
    _
  %s6 = ssub.s32 1, %s4
  %s7 = scalar_select 0, %s6, %s4
  $region1: #{tpu_custom_call.1} parent=0
    #allocation2 [shape = 'u8[4096]{0}', space=vmem, size = 0x1000, scoped, tag = 'input window, operand 0, single buffered']
    #allocation3 [shape = 's32[1]{0}', space=sflag, size = 0x4, scoped, tag = 'scoped memory for tpu_custom_call.1']
    #allocation4 [shape = 's32[1]{0}', space=sflag, size = 0x4, scoped, tag = 'scoped memory for tpu_custom_call.1']
    #allocation5 [shape = 'u8[643072]{0}', space=vmem, size = 0x9d000, scoped, tag = 'input window, operand 1, single buffered']
    #allocation6 [shape = 's32[1]{0}', space=sflag, size = 0x4, scoped, tag = 'scoped memory for tpu_custom_call.1']
    #allocation7 [shape = 'u8[16384]{0}', space=vmem, size = 0x4000, scoped, tag = 'input window, operand 2, single buffered']
    #allocation8 [shape = 'u8[4096]{0}', space=vmem, size = 0x1000, scoped, tag = 'output window, operand 0, single buffered']
    %8 = vsyncpa [#allocation3], 0
    %9 = vsyncpa [#allocation6], 0
    %10 = vsyncpa [#allocation4], 0
    // Predicated region
    $region2: #{tpu_custom_call.1} parent=1 // pred_check
      _
    $region3: #{tpu_custom_call.1} parent=1 // pred_check_branch
      %12 = sbr.rel (0) target = $region5
    $region4: #{tpu_custom_call.1} parent=1 // pred_region
      %14 = vsyncadd [#allocation3], 0
      %s16 = sshll.u32 %s0, 4
      %s17 = int_to_ptr.hbm [resolvable:$true] %s16
      %s18 = sshll.u32 [#allocation2], 4
      %s19 = int_to_ptr.vmem [resolvable:$true] %s18
      %21 = dma.hbm_to_vmem [thread:$0]  %s17, 128, %s19, [#allocation3]
    $region5: #{tpu_custom_call.1} parent=1 // pred_fallthru
      _
    // Predicated region
    $region6: #{tpu_custom_call.1} parent=1 // pred_check
      _
    $region7: #{tpu_custom_call.1} parent=1 // pred_check_branch
      %23 = sbr.rel (0) target = $region9
    $region8: #{tpu_custom_call.1} parent=1 // pred_region
      %25 = vsyncadd [#allocation6], 0
      %s26 = sshll.u32 %s1, 4
      %s27 = int_to_ptr.hbm [resolvable:$true] %s26
      %s28 = sshll.u32 [#allocation5], 4
      %s29 = int_to_ptr.vmem [resolvable:$true] %s28
      %34 = dma.hbm_to_vmem [thread:$0]  %s27, 20096, %s29, [#allocation6], 128, 128, 8
    $region9: #{tpu_custom_call.1} parent=1 // pred_fallthru
      _
    // Predicated region
    $region10: #{tpu_custom_call.1} parent=1 // pred_check
      _
    $region11: #{tpu_custom_call.1} parent=1 // pred_check_branch
      %36 = sbr.rel (0) target = $region13
    $region12: #{tpu_custom_call.1} parent=1 // pred_region
      %38 = vsyncadd [#allocation6], 0
      %s39 = sshll.u32 %s2, 4
      %s40 = int_to_ptr.hbm [resolvable:$true] %s39
      %s41 = sshll.u32 [#allocation7], 4
      %s42 = int_to_ptr.vmem [resolvable:$true] %s41
      %47 = dma.hbm_to_vmem [thread:$0]  %s40, 512, %s42, [#allocation6], 128, 128, 8
    $region13: #{tpu_custom_call.1} parent=1 // pred_fallthru
      _
    // Predicated region
    $region14: #{tpu_custom_call.1} parent=1 // pred_check
      _
    $region15: #{tpu_custom_call.1} parent=1 // pred_check_branch
      %49 = sbr.rel (0) target = $region17
    $region16: #{tpu_custom_call.1} parent=1 // pred_region
      %51 = dma.done [#allocation3], 128
    $region17: #{tpu_custom_call.1} parent=1 // pred_fallthru
      _
    // Predicated region
    $region18: #{tpu_custom_call.1} parent=1 // pred_check
      _
    $region19: #{tpu_custom_call.1} parent=1 // pred_check_branch
      %53 = sbr.rel (0) target = $region21
    $region20: #{tpu_custom_call.1} parent=1 // pred_region
      %55 = dma.done [#allocation6], 20096
    $region21: #{tpu_custom_call.1} parent=1 // pred_fallthru
      _
    // Predicated region
    $region22: #{tpu_custom_call.1} parent=1 // pred_check
      _
    $region23: #{tpu_custom_call.1} parent=1 // pred_check_branch
      %57 = sbr.rel (0) target = $region25
    $region24: #{tpu_custom_call.1} parent=1 // pred_region
      %59 = dma.done [#allocation6], 512
    $region25: #{tpu_custom_call.1} parent=1 // pred_fallthru
      _
    %v60 = vld [vmem:[#allocation2] sm:$0xff]
    %v61 = vld [vmem:[#allocation5] sm:$0xff]
    %v62 = vld [vmem:[#allocation7] sm:$0x1]
    %v63 = vperm.slane %v62, 0
    %vm64 = vcmask 64512
    %v66 = vsel %vm64, %v60, 0
    %68 = vmatpush.msra.mxu0 0.0
    %69 = vmatpush.msra.mxu0 0.0
    %70 = vmatpush.msra.mxu0 0.0
    %71 = vmatpush.msra.mxu0 0.0
    %72 = vmatpush.msra.mxu0 0.0
    %73 = vmatpush.msra.mxu0 0.0
    %74 = vmatpush.msra.mxu0 0.0
    %75 = vmatpush.msra.mxu0 0.0
    %76 = vmatpush.msra.mxu0 0.0
    %77 = vmatpush.msra.mxu0 0.0
    %78 = vmatpush.msra.mxu0 0.0
    %79 = vmatpush.msra.mxu0 0.0
    %80 = vmatpush.msra.mxu0 0.0
    %81 = vmatpush.msra.mxu0 0.0
    %82 = vmatpush.msra.mxu0 0.0
    %83 = vmatpush.msra.mxu0 %v61
    %84 = vmatmul.f32.gmra.mxu0 %v66
    %v85 = vpop.f32.mrf.mxu0
    %v86 = vadd.f32 %v63, %v85
    %87 = vdwg.mxu0
    %v88 = vmax.f32 %v86, 0.0
    %v89 = vld [vmem:[#allocation5 + $0x8] sm:$0xff]
    %v90 = vld [vmem:[#allocation5 + $0x10] sm:$0xff]
    %v91 = vld [vmem:[#allocation5 + $0x18] sm:$0xff]
    %v92 = vld [vmem:[#allocation5 + $0x20] sm:$0xff]
    %v93 = vld [vmem:[#allocation7 + $0x1] sm:$0x1]
    %v94 = vperm.slane %v93, 0
    %vm95 = vcmask 261120
    %v97 = vsel %vm95, %v88, 0
    %99 = vmatpush.msra.mxu0 0.0
    %100 = vmatpush.msra.mxu0 0.0
    %101 = vmatpush.msra.mxu0 0.0
    %102 = vmatpush.msra.mxu0 0.0
    %103 = vmatpush.msra.mxu0 0.0
    %104 = vmatpush.msra.mxu0 0.0
    %105 = vmatpush.msra.mxu0 0.0
    %106 = vmatpush.msra.mxu0 0.0
    %107 = vmatpush.msra.mxu0 0.0
    %108 = vmatpush.msra.mxu0 0.0
    %109 = vmatpush.msra.mxu0 0.0
    %110 = vmatpush.msra.mxu0 0.0
    %111 = vmatpush.msra.mxu0 %v92
    %112 = vmatpush.msra.mxu0 %v91
    %113 = vmatpush.msra.mxu0 %v90
    %114 = vmatpush.msra.mxu0 %v89
    %115 = vmatmul.f32.gmra.mxu0 %v97
    %v116 = vpop.f32.mrf.mxu0
    %v117 = vadd.f32 %v94, %v116
    %118 = vdwg.mxu0
    %v119 = vld [vmem:[#allocation5 + $0x28] sm:$0xff]
    %v120 = vld [vmem:[#allocation5 + $0x30] sm:$0xff]
    %v121 = vld [vmem:[#allocation5 + $0x38] sm:$0xff]
    %v122 = vld [vmem:[#allocation5 + $0x40] sm:$0xff]
    %v123 = vld [vmem:[#allocation5 + $0x48] sm:$0xff]
    %v124 = vld [vmem:[#allocation5 + $0x50] sm:$0xff]
    %v125 = vld [vmem:[#allocation5 + $0x58] sm:$0xff]
    %v126 = vld [vmem:[#allocation5 + $0x60] sm:$0xff]
    %v127 = vld [vmem:[#allocation7 + $0x2] sm:$0x1]
    %v128 = vperm.slane %v127, 0
    %vm129 = vcmask 523264
    %v131 = vsel %vm129, %v117, 0
    %133 = vmatpush.msra.mxu0 0.0
    %134 = vmatpush.msra.mxu0 0.0
    %135 = vmatpush.msra.mxu0 0.0
    %136 = vmatpush.msra.mxu0 0.0
    %137 = vmatpush.msra.mxu0 0.0
    %138 = vmatpush.msra.mxu0 0.0
    %139 = vmatpush.msra.mxu0 0.0
    %140 = vmatpush.msra.mxu0 0.0
    %141 = vmatpush.msra.mxu0 %v126
    %142 = vmatpush.msra.mxu0 %v125
    %143 = vmatpush.msra.mxu0 %v124
    %144 = vmatpush.msra.mxu0 %v123
    %145 = vmatpush.msra.mxu0 %v122
    %146 = vmatpush.msra.mxu0 %v121
    %147 = vmatpush.msra.mxu0 %v120
    %148 = vmatpush.msra.mxu0 %v119
    %149 = vmatmul.f32.gmra.mxu0 %v131
    %v150 = vpop.f32.mrf.mxu0
    %v151 = vadd.f32 %v128, %v150
    %152 = vdwg.mxu0
    %v153 = vld [vmem:[#allocation5 + $0x68] sm:$0xff]
    %v154 = vld [vmem:[#allocation5 + $0x70] sm:$0xff]
    %v155 = vld [vmem:[#allocation5 + $0x78] sm:$0xff]
    %v156 = vld [vmem:[#allocation5 + $0x80] sm:$0xff]
    %v157 = vld [vmem:[#allocation5 + $0x88] sm:$0xff]
    %v158 = vld [vmem:[#allocation5 + $0x90] sm:$0xff]
    %v159 = vld [vmem:[#allocation5 + $0x98] sm:$0xff]
    %v160 = vld [vmem:[#allocation5 + $0xa0] sm:$0xff]
    %161 = vmatpush.msra.mxu0 0.0
    %162 = vmatpush.msra.mxu0 0.0
    %163 = vmatpush.msra.mxu0 0.0
    %164 = vmatpush.msra.mxu0 0.0
    %165 = vmatpush.msra.mxu0 0.0
    %166 = vmatpush.msra.mxu0 0.0
    %167 = vmatpush.msra.mxu0 0.0
    %168 = vmatpush.msra.mxu0 0.0
    %169 = vmatpush.msra.mxu0 %v160
    %170 = vmatpush.msra.mxu0 %v159
    %171 = vmatpush.msra.mxu0 %v158
    %172 = vmatpush.msra.mxu0 %v157
    %173 = vmatpush.msra.mxu0 %v156
    %174 = vmatpush.msra.mxu0 %v155
    %175 = vmatpush.msra.mxu0 %v154
    %176 = vmatpush.msra.mxu0 %v153
    %177 = vmatmul.f32.gmra.mxu0 %v131
    %v178 = vpop.f32.mrf.mxu0
    %v179 = vadd.f32 0.0, %v178
    %180 = vdwg.mxu0
    %v181 = vld [vmem:[#allocation5 + $0xa8] sm:$0xff]
    %v182 = vld [vmem:[#allocation5 + $0xb0] sm:$0xff]
    %v183 = vld [vmem:[#allocation5 + $0xb8] sm:$0xff]
    %v184 = vld [vmem:[#allocation5 + $0xc0] sm:$0xff]
    %v185 = vld [vmem:[#allocation5 + $0xc8] sm:$0xff]
    %v186 = vld [vmem:[#allocation5 + $0xd0] sm:$0xff]
    %v187 = vld [vmem:[#allocation5 + $0xd8] sm:$0xff]
    %v188 = vld [vmem:[#allocation5 + $0xe0] sm:$0xff]
    %189 = vmatpush.msra.mxu0 0.0
    %190 = vmatpush.msra.mxu0 0.0
    %191 = vmatpush.msra.mxu0 0.0
    %192 = vmatpush.msra.mxu0 0.0
    %193 = vmatpush.msra.mxu0 0.0
    %194 = vmatpush.msra.mxu0 0.0
    %195 = vmatpush.msra.mxu0 0.0
    %196 = vmatpush.msra.mxu0 0.0
    %197 = vmatpush.msra.mxu0 %v188
    %198 = vmatpush.msra.mxu0 %v187
    %199 = vmatpush.msra.mxu0 %v186
    %200 = vmatpush.msra.mxu0 %v185
    %201 = vmatpush.msra.mxu0 %v184
    %202 = vmatpush.msra.mxu0 %v183
    %203 = vmatpush.msra.mxu0 %v182
    %204 = vmatpush.msra.mxu0 %v181
    %205 = vmatmul.f32.gmra.mxu0 %v131
    %v206 = vpop.f32.mrf.mxu0
    %v207 = vadd.f32 0.0, %v206
    %208 = vdwg.mxu0
    %v209 = vld [vmem:[#allocation7 + $0x3] sm:$0x1]
    %211 = vrot.lane.b32.xlu0 %v151, 64
    %v212 = vpop.permute.xlu0 %211
    %vm213 = vcmask 130048
    %v214 = vsel %vm213, %v151, 0
    %v216 = vsel %vm213, %v212, 0
    %218 = vmatpush.xpose.msra.mxu0 0.0
    %219 = vmatpush.xpose.msra.mxu0 0.0
    %220 = vmatpush.xpose.msra.mxu0 0.0
    %221 = vmatpush.xpose.msra.mxu0 0.0
    %222 = vmatpush.xpose.msra.mxu0 0.0
    %223 = vmatpush.xpose.msra.mxu0 0.0
    %224 = vmatpush.xpose.msra.mxu0 0.0
    %225 = vmatpush.xpose.msra.mxu0 0.0
    %226 = vmatpush.xpose.msra.mxu0 0.0
    %227 = vmatpush.xpose.msra.mxu0 0.0
    %228 = vmatpush.xpose.msra.mxu0 0.0
    %229 = vmatpush.xpose.msra.mxu0 0.0
    %230 = vmatpush.xpose.msra.mxu0 0.0
    %231 = vmatpush.xpose.msra.mxu0 0.0
    %232 = vmatpush.xpose.msra.mxu0 0.0
    %233 = vmatpush.xpose.msra.mxu0 %v216
    %234 = vmatmul.f32.gmra.mxu0 %v214
    %v235 = vpop.f32.mrf.mxu0
    %v236 = vadd.f32 0.0, %v235
    %237 = vdwg.mxu0
    %v238 = vsel %vm64, %v236, -inf
    %239 = vmax.xlane.f32.xlu0 %v238
    %v240 = vpop.xlane.xlu0 %239
    %v241 = vsub.f32 %v236, %v240
    %v242 = vmul.f32 %v241, 1.442695
    %v243 = vpow.pop %v242
    %v244 = vsel %vm64, %v243, 0.0
    %245 = vadd.xlane.f32.xlu0 %v244
    %v246 = vpop.xlane.xlu0 %245
    %v247 = vrcp.pop %v246
    %v248 = vmul.f32 %v246, %v247
    %v249 = vsub.f32 1.0, %v248
    %v250 = vmul.f32 %v247, %v249
    %v251 = vadd.f32 %v247, %v250
    %vm252 = vweird.f32 %v246
    %vm253 = vweird.f32 %v247
    %vm254 = vmor %vm252, %vm253
    %v255 = vsel %vm254, %v247, %v251
    %v256 = vand.u32 2147483647, %v246
    %vm257 = vcmp.eq.f32.partialorder %v256, 8.507059e+37
    %v258 = vand.u32 %v246, 2147483648
    %v259 = vor.u32 1.1754944e-38, %v258
    %v260 = vsel %vm257, %v259, %v255
    %v261 = vmul.f32 %v243, %v260
    %v263 = vsel %vm64, %v261, 0
    %265 = vmatpush.msra.mxu0 0.0
    %266 = vmatpush.msra.mxu0 0.0
    %267 = vmatpush.msra.mxu0 0.0
    %268 = vmatpush.msra.mxu0 0.0
    %269 = vmatpush.msra.mxu0 0.0
    %270 = vmatpush.msra.mxu0 0.0
    %271 = vmatpush.msra.mxu0 0.0
    %272 = vmatpush.msra.mxu0 0.0
    %273 = vmatpush.msra.mxu0 0.0
    %274 = vmatpush.msra.mxu0 0.0
    %275 = vmatpush.msra.mxu0 0.0
    %276 = vmatpush.msra.mxu0 0.0
    %277 = vmatpush.msra.mxu0 0.0
    %278 = vmatpush.msra.mxu0 0.0
    %279 = vmatpush.msra.mxu0 0.0
    %280 = vmatpush.msra.mxu0 %v179
    %281 = vmatmul.f32.gmra.mxu0 %v263
    %v282 = vpop.f32.mrf.mxu0
    %v283 = vadd.f32 0.0, %v282
    %284 = vdwg.mxu0
    %v285 = vperm.slane %v209, 0
    %v286 = vadd.f32 %v285, %v283
    %287 = vrot.lane.b32.xlu0 %v151, 112
    %v288 = vpop.permute.xlu0 %287
    %289 = vrot.lane.b32.xlu0 %v151, 48
    %v290 = vpop.permute.xlu0 %289
    %v291 = vsel %vm213, %v288, 0
    %v293 = vsel %vm213, %v290, 0
    %295 = vmatpush.xpose.msra.mxu0 0.0
    %296 = vmatpush.xpose.msra.mxu0 0.0
    %297 = vmatpush.xpose.msra.mxu0 0.0
    %298 = vmatpush.xpose.msra.mxu0 0.0
    %299 = vmatpush.xpose.msra.mxu0 0.0
    %300 = vmatpush.xpose.msra.mxu0 0.0
    %301 = vmatpush.xpose.msra.mxu0 0.0
    %302 = vmatpush.xpose.msra.mxu0 0.0
    %303 = vmatpush.xpose.msra.mxu0 0.0
    %304 = vmatpush.xpose.msra.mxu0 0.0
    %305 = vmatpush.xpose.msra.mxu0 0.0
    %306 = vmatpush.xpose.msra.mxu0 0.0
    %307 = vmatpush.xpose.msra.mxu0 0.0
    %308 = vmatpush.xpose.msra.mxu0 0.0
    %309 = vmatpush.xpose.msra.mxu0 0.0
    %310 = vmatpush.xpose.msra.mxu0 %v293
    %311 = vmatmul.f32.gmra.mxu0 %v291
    %v312 = vpop.f32.mrf.mxu0
    %v313 = vadd.f32 0.0, %v312
    %314 = vdwg.mxu0
    %v315 = vsel %vm64, %v313, -inf
    %316 = vmax.xlane.f32.xlu0 %v315
    %v317 = vpop.xlane.xlu0 %316
    %v318 = vsub.f32 %v313, %v317
    %v319 = vmul.f32 %v318, 1.442695
    %v320 = vpow.pop %v319
    %v321 = vsel %vm64, %v320, 0.0
    %322 = vadd.xlane.f32.xlu0 %v321
    %v323 = vpop.xlane.xlu0 %322
    %v324 = vrcp.pop %v323
    %v325 = vmul.f32 %v323, %v324
    %v326 = vsub.f32 1.0, %v325
    %v327 = vmul.f32 %v324, %v326
    %v328 = vadd.f32 %v324, %v327
    %vm329 = vweird.f32 %v323
    %vm330 = vweird.f32 %v324
    %vm331 = vmor %vm329, %vm330
    %v332 = vsel %vm331, %v324, %v328
    %v333 = vand.u32 2147483647, %v323
    %vm334 = vcmp.eq.f32.partialorder %v333, 8.507059e+37
    %v335 = vand.u32 %v323, 2147483648
    %v336 = vor.u32 1.1754944e-38, %v335
    %v337 = vsel %vm334, %v336, %v332
    %v338 = vmul.f32 %v320, %v337
    %340 = vrot.lane.b32.xlu0 %v179, 64
    %v341 = vpop.permute.xlu0 %340
    %v344 = vsel %vm64, %v338, 0
    %346 = vmatpush.msra.mxu0 0.0
    %347 = vmatpush.msra.mxu0 0.0
    %348 = vmatpush.msra.mxu0 0.0
    %349 = vmatpush.msra.mxu0 0.0
    %350 = vmatpush.msra.mxu0 0.0
    %351 = vmatpush.msra.mxu0 0.0
    %352 = vmatpush.msra.mxu0 0.0
    %353 = vmatpush.msra.mxu0 0.0
    %354 = vmatpush.msra.mxu0 0.0
    %355 = vmatpush.msra.mxu0 0.0
    %356 = vmatpush.msra.mxu0 0.0
    %357 = vmatpush.msra.mxu0 0.0
    %358 = vmatpush.msra.mxu0 0.0
    %359 = vmatpush.msra.mxu0 0.0
    %360 = vmatpush.msra.mxu0 0.0
    %361 = vmatpush.msra.mxu0 %v341
    %362 = vmatmul.f32.gmra.mxu0 %v344
    %v363 = vpop.f32.mrf.mxu0
    %v364 = vadd.f32 0.0, %v363
    %365 = vdwg.mxu0
    %v366 = vadd.f32 %v286, %v364
    %367 = vrot.lane.b32.xlu0 %v151, 96
    %v368 = vpop.permute.xlu0 %367
    %369 = vrot.lane.b32.xlu0 %v151, 32
    %v370 = vpop.permute.xlu0 %369
    %v371 = vsel %vm213, %v368, 0
    %v373 = vsel %vm213, %v370, 0
    %375 = vmatpush.xpose.msra.mxu0 0.0
    %376 = vmatpush.xpose.msra.mxu0 0.0
    %377 = vmatpush.xpose.msra.mxu0 0.0
    %378 = vmatpush.xpose.msra.mxu0 0.0
    %379 = vmatpush.xpose.msra.mxu0 0.0
    %380 = vmatpush.xpose.msra.mxu0 0.0
    %381 = vmatpush.xpose.msra.mxu0 0.0
    %382 = vmatpush.xpose.msra.mxu0 0.0
    %383 = vmatpush.xpose.msra.mxu0 0.0
    %384 = vmatpush.xpose.msra.mxu0 0.0
    %385 = vmatpush.xpose.msra.mxu0 0.0
    %386 = vmatpush.xpose.msra.mxu0 0.0
    %387 = vmatpush.xpose.msra.mxu0 0.0
    %388 = vmatpush.xpose.msra.mxu0 0.0
    %389 = vmatpush.xpose.msra.mxu0 0.0
    %390 = vmatpush.xpose.msra.mxu0 %v373
    %391 = vmatmul.f32.gmra.mxu0 %v371
    %v392 = vpop.f32.mrf.mxu0
    %v393 = vadd.f32 0.0, %v392
    %394 = vdwg.mxu0
    %v395 = vsel %vm64, %v393, -inf
    %396 = vmax.xlane.f32.xlu0 %v395
    %v397 = vpop.xlane.xlu0 %396
    %v398 = vsub.f32 %v393, %v397
    %v399 = vmul.f32 %v398, 1.442695
    %v400 = vpow.pop %v399
    %v401 = vsel %vm64, %v400, 0.0
    %402 = vadd.xlane.f32.xlu0 %v401
    %v403 = vpop.xlane.xlu0 %402
    %v404 = vrcp.pop %v403
    %v405 = vmul.f32 %v403, %v404
    %v406 = vsub.f32 1.0, %v405
    %v407 = vmul.f32 %v404, %v406
    %v408 = vadd.f32 %v404, %v407
    %vm409 = vweird.f32 %v403
    %vm410 = vweird.f32 %v404
    %vm411 = vmor %vm409, %vm410
    %v412 = vsel %vm411, %v404, %v408
    %v413 = vand.u32 2147483647, %v403
    %vm414 = vcmp.eq.f32.partialorder %v413, 8.507059e+37
    %v415 = vand.u32 %v403, 2147483648
    %v416 = vor.u32 1.1754944e-38, %v415
    %v417 = vsel %vm414, %v416, %v412
    %v418 = vmul.f32 %v400, %v417
    %v420 = vsel %vm64, %v418, 0
    %422 = vmatpush.msra.mxu0 0.0
    %423 = vmatpush.msra.mxu0 0.0
    %424 = vmatpush.msra.mxu0 0.0
    %425 = vmatpush.msra.mxu0 0.0
    %426 = vmatpush.msra.mxu0 0.0
    %427 = vmatpush.msra.mxu0 0.0
    %428 = vmatpush.msra.mxu0 0.0
    %429 = vmatpush.msra.mxu0 0.0
    %430 = vmatpush.msra.mxu0 0.0
    %431 = vmatpush.msra.mxu0 0.0
    %432 = vmatpush.msra.mxu0 0.0
    %433 = vmatpush.msra.mxu0 0.0
    %434 = vmatpush.msra.mxu0 0.0
    %435 = vmatpush.msra.mxu0 0.0
    %436 = vmatpush.msra.mxu0 0.0
    %437 = vmatpush.msra.mxu0 %v207
    %438 = vmatmul.f32.gmra.mxu0 %v420
    %v439 = vpop.f32.mrf.mxu0
    %v440 = vadd.f32 0.0, %v439
    %441 = vdwg.mxu0
    %v442 = vadd.f32 %v366, %v440
    %443 = vrot.lane.b32.xlu0 %v151, 80
    %v444 = vpop.permute.xlu0 %443
    %445 = vrot.lane.b32.xlu0 %v151, 16
    %v446 = vpop.permute.xlu0 %445
    %v447 = vsel %vm213, %v444, 0
    %v449 = vsel %vm213, %v446, 0
    %451 = vmatpush.xpose.msra.mxu0 0.0
    %452 = vmatpush.xpose.msra.mxu0 0.0
    %453 = vmatpush.xpose.msra.mxu0 0.0
    %454 = vmatpush.xpose.msra.mxu0 0.0
    %455 = vmatpush.xpose.msra.mxu0 0.0
    %456 = vmatpush.xpose.msra.mxu0 0.0
    %457 = vmatpush.xpose.msra.mxu0 0.0
    %458 = vmatpush.xpose.msra.mxu0 0.0
    %459 = vmatpush.xpose.msra.mxu0 0.0
    %460 = vmatpush.xpose.msra.mxu0 0.0
    %461 = vmatpush.xpose.msra.mxu0 0.0
    %462 = vmatpush.xpose.msra.mxu0 0.0
    %463 = vmatpush.xpose.msra.mxu0 0.0
    %464 = vmatpush.xpose.msra.mxu0 0.0
    %465 = vmatpush.xpose.msra.mxu0 0.0
    %466 = vmatpush.xpose.msra.mxu0 %v449
    %467 = vmatmul.f32.gmra.mxu0 %v447
    %v468 = vpop.f32.mrf.mxu0
    %v469 = vadd.f32 0.0, %v468
    %470 = vdwg.mxu0
    %v471 = vsel %vm64, %v469, -inf
    %472 = vmax.xlane.f32.xlu0 %v471
    %v473 = vpop.xlane.xlu0 %472
    %v474 = vsub.f32 %v469, %v473
    %v475 = vmul.f32 %v474, 1.442695
    %v476 = vpow.pop %v475
    %v477 = vsel %vm64, %v476, 0.0
    %478 = vadd.xlane.f32.xlu0 %v477
    %v479 = vpop.xlane.xlu0 %478
    %v480 = vrcp.pop %v479
    %v481 = vmul.f32 %v479, %v480
    %v482 = vsub.f32 1.0, %v481
    %v483 = vmul.f32 %v480, %v482
    %v484 = vadd.f32 %v480, %v483
    %vm485 = vweird.f32 %v479
    %vm486 = vweird.f32 %v480
    %vm487 = vmor %vm485, %vm486
    %v488 = vsel %vm487, %v480, %v484
    %v489 = vand.u32 2147483647, %v479
    %vm490 = vcmp.eq.f32.partialorder %v489, 8.507059e+37
    %v491 = vand.u32 %v479, 2147483648
    %v492 = vor.u32 1.1754944e-38, %v491
    %v493 = vsel %vm490, %v492, %v488
    %v494 = vmul.f32 %v476, %v493
    %496 = vrot.lane.b32.xlu0 %v207, 64
    %v497 = vpop.permute.xlu0 %496
    %v500 = vsel %vm64, %v494, 0
    %502 = vmatpush.msra.mxu0 0.0
    %503 = vmatpush.msra.mxu0 0.0
    %504 = vmatpush.msra.mxu0 0.0
    %505 = vmatpush.msra.mxu0 0.0
    %506 = vmatpush.msra.mxu0 0.0
    %507 = vmatpush.msra.mxu0 0.0
    %508 = vmatpush.msra.mxu0 0.0
    %509 = vmatpush.msra.mxu0 0.0
    %510 = vmatpush.msra.mxu0 0.0
    %511 = vmatpush.msra.mxu0 0.0
    %512 = vmatpush.msra.mxu0 0.0
    %513 = vmatpush.msra.mxu0 0.0
    %514 = vmatpush.msra.mxu0 0.0
    %515 = vmatpush.msra.mxu0 0.0
    %516 = vmatpush.msra.mxu0 0.0
    %517 = vmatpush.msra.mxu0 %v497
    %518 = vmatmul.f32.gmra.mxu0 %v500
    %v519 = vpop.f32.mrf.mxu0
    %v520 = vadd.f32 0.0, %v519
    %521 = vdwg.mxu0
    %v522 = vadd.f32 %v442, %v520
    %v523 = vadd.f32 %v117, %v522
    %v524 = vld [vmem:[#allocation7 + $0x4] sm:$0x1]
    %v525 = vld [vmem:[#allocation7 + $0x5] sm:$0x1]
    %v526 = vsel %vm129, %v523, 0.0
    %527 = vadd.xlane.f32.xlu0 %v526
    %v528 = vpop.xlane.xlu0 %527
    %v529 = vrcp.pop 64.0
    %v530 = vmul.f32 64.0, %v529
    %v531 = vsub.f32 1.0, %v530
    %v532 = vmul.f32 %v529, %v531
    %v533 = vadd.f32 %v529, %v532
    %vm534 = vweird.f32 %v529
    %v535 = vsel %vm534, %v529, %v533
    %v536 = vmul.f32 %v528, %v535
    %v537 = vmul.f32 %v523, %v523
    %v538 = vsel %vm129, %v537, 0.0
    %539 = vadd.xlane.f32.xlu0 %v538
    %v540 = vpop.xlane.xlu0 %539
    %v541 = vmul.f32 %v540, %v535
    %v542 = vmul.f32 %v536, %v536
    %v543 = vsub.f32 %v541, %v542
    %v544 = vsub.f32 %v523, %v536
    %v545 = vadd.f32 %v543, 1e-05
    %v546 = vrsqrt.pop %v545
    %v547 = vmul.f32 %v546, %v545
    %v548 = vmul.f32 %v547, %v546
    %v549 = vmul.f32 0.5, %v548
    %v550 = vsub.f32 1.5, %v549
    %v551 = vmul.f32 %v546, %v550
    %vm552 = vweird.f32 %v545
    %vm553 = vweird.f32 %v546
    %vm554 = vmor %vm552, %vm553
    %v555 = vsel %vm554, %v546, %v551
    %v556 = vmul.f32 %v544, %v555
    %v557 = vperm.slane %v524, 0
    %v558 = vmul.f32 %v556, %v557
    %v559 = vperm.slane %v525, 0
    %v560 = vadd.f32 %v558, %v559
    %v561 = vld [vmem:[#allocation5 + $0xe8] sm:$0xff]
    %v562 = vld [vmem:[#allocation5 + $0xf0] sm:$0xff]
    %v563 = vld [vmem:[#allocation5 + $0xf8] sm:$0xff]
    %v564 = vld [vmem:[#allocation5 + $0x100] sm:$0xff]
    %v565 = vld [vmem:[#allocation5 + $0x108] sm:$0xff]
    %v566 = vld [vmem:[#allocation5 + $0x110] sm:$0xff]
    %v567 = vld [vmem:[#allocation5 + $0x118] sm:$0xff]
    %v568 = vld [vmem:[#allocation5 + $0x120] sm:$0xff]
    %v569 = vld [vmem:[#allocation7 + $0x6] sm:$0x1]
    %v570 = vperm.slane %v569, 0
    %v572 = vsel %vm129, %v560, 0
    %574 = vmatpush.msra.mxu0 0.0
    %575 = vmatpush.msra.mxu0 0.0
    %576 = vmatpush.msra.mxu0 0.0
    %577 = vmatpush.msra.mxu0 0.0
    %578 = vmatpush.msra.mxu0 0.0
    %579 = vmatpush.msra.mxu0 0.0
    %580 = vmatpush.msra.mxu0 0.0
    %581 = vmatpush.msra.mxu0 0.0
    %582 = vmatpush.msra.mxu0 %v568
    %583 = vmatpush.msra.mxu0 %v567
    %584 = vmatpush.msra.mxu0 %v566
    %585 = vmatpush.msra.mxu0 %v565
    %586 = vmatpush.msra.mxu0 %v564
    %587 = vmatpush.msra.mxu0 %v563
    %588 = vmatpush.msra.mxu0 %v562
    %589 = vmatpush.msra.mxu0 %v561
    %590 = vmatmul.f32.gmra.mxu0 %v572
    %v591 = vpop.f32.mrf.mxu0
    %v592 = vadd.f32 %v570, %v591
    %593 = vdwg.mxu0
    %v594 = vmax.f32 %v592, 0.0
    %v595 = vld [vmem:[#allocation5 + $0x128] sm:$0xff]
    %v596 = vld [vmem:[#allocation5 + $0x130] sm:$0xff]
    %v597 = vld [vmem:[#allocation5 + $0x138] sm:$0xff]
    %v598 = vld [vmem:[#allocation5 + $0x140] sm:$0xff]
    %v599 = vld [vmem:[#allocation5 + $0x148] sm:$0xff]
    %v600 = vld [vmem:[#allocation5 + $0x150] sm:$0xff]
    %v601 = vld [vmem:[#allocation5 + $0x158] sm:$0xff]
    %v602 = vld [vmem:[#allocation5 + $0x160] sm:$0xff]
    %v603 = vld [vmem:[#allocation5 + $0x168] sm:$0xff]
    %v604 = vld [vmem:[#allocation5 + $0x170] sm:$0xff]
    %v605 = vld [vmem:[#allocation5 + $0x178] sm:$0xff]
    %v606 = vld [vmem:[#allocation5 + $0x180] sm:$0xff]
    %v607 = vld [vmem:[#allocation5 + $0x188] sm:$0xff]
    %v608 = vld [vmem:[#allocation5 + $0x190] sm:$0xff]
    %v609 = vld [vmem:[#allocation5 + $0x198] sm:$0xff]
    %v610 = vld [vmem:[#allocation5 + $0x1a0] sm:$0xff]
    %v611 = vld [vmem:[#allocation7 + $0x7] sm:$0x1]
    %v612 = vperm.slane %v611, 0
    %613 = vmatpush.msra.mxu0 %v610
    %614 = vmatpush.msra.mxu0 %v609
    %615 = vmatpush.msra.mxu0 %v608
    %616 = vmatpush.msra.mxu0 %v607
    %617 = vmatpush.msra.mxu0 %v606
    %618 = vmatpush.msra.mxu0 %v605
    %619 = vmatpush.msra.mxu0 %v604
    %620 = vmatpush.msra.mxu0 %v603
    %621 = vmatpush.msra.mxu0 %v602
    %622 = vmatpush.msra.mxu0 %v601
    %623 = vmatpush.msra.mxu0 %v600
    %624 = vmatpush.msra.mxu0 %v599
    %625 = vmatpush.msra.mxu0 %v598
    %626 = vmatpush.msra.mxu0 %v597
    %627 = vmatpush.msra.mxu0 %v596
    %628 = vmatpush.msra.mxu0 %v595
    %629 = vmatmul.f32.gmra.mxu0 %v594
    %v630 = vpop.f32.mrf.mxu0
    %v631 = vadd.f32 %v612, %v630
    %632 = vdwg.mxu0
    %v633 = vadd.f32 %v560, %v631
    %v634 = vld [vmem:[#allocation7 + $0x8] sm:$0x1]
    %v635 = vld [vmem:[#allocation7 + $0x9] sm:$0x1]
    %v636 = vsel %vm129, %v633, 0.0
    %637 = vadd.xlane.f32.xlu0 %v636
    %v638 = vpop.xlane.xlu0 %637
    %v639 = vmul.f32 %v638, %v535
    %v640 = vmul.f32 %v633, %v633
    %v641 = vsel %vm129, %v640, 0.0
    %642 = vadd.xlane.f32.xlu0 %v641
    %v643 = vpop.xlane.xlu0 %642
    %v644 = vmul.f32 %v643, %v535
    %v645 = vmul.f32 %v639, %v639
    %v646 = vsub.f32 %v644, %v645
    %v647 = vsub.f32 %v633, %v639
    %v648 = vadd.f32 %v646, 1e-05
    %v649 = vrsqrt.pop %v648
    %v650 = vmul.f32 %v649, %v648
    %v651 = vmul.f32 %v650, %v649
    %v652 = vmul.f32 0.5, %v651
    %v653 = vsub.f32 1.5, %v652
    %v654 = vmul.f32 %v649, %v653
    %vm655 = vweird.f32 %v648
    %vm656 = vweird.f32 %v649
    %vm657 = vmor %vm655, %vm656
    %v658 = vsel %vm657, %v649, %v654
    %v659 = vmul.f32 %v647, %v658
    %v660 = vperm.slane %v634, 0
    %v661 = vmul.f32 %v659, %v660
    %v662 = vperm.slane %v635, 0
    %v663 = vadd.f32 %v661, %v662
    %v664 = vld [vmem:[#allocation5 + $0x1a8] sm:$0xff]
    %v665 = vld [vmem:[#allocation5 + $0x1b0] sm:$0xff]
    %v666 = vld [vmem:[#allocation5 + $0x1b8] sm:$0xff]
    %v667 = vld [vmem:[#allocation5 + $0x1c0] sm:$0xff]
    %v668 = vld [vmem:[#allocation5 + $0x1c8] sm:$0xff]
    %v669 = vld [vmem:[#allocation5 + $0x1d0] sm:$0xff]
    %v670 = vld [vmem:[#allocation5 + $0x1d8] sm:$0xff]
    %v671 = vld [vmem:[#allocation5 + $0x1e0] sm:$0xff]
    %v672 = vld [vmem:[#allocation7 + $0xa] sm:$0x1]
    %v673 = vperm.slane %v672, 0
    %v675 = vsel %vm129, %v663, 0
    %677 = vmatpush.msra.mxu0 0.0
    %678 = vmatpush.msra.mxu0 0.0
    %679 = vmatpush.msra.mxu0 0.0
    %680 = vmatpush.msra.mxu0 0.0
    %681 = vmatpush.msra.mxu0 0.0
    %682 = vmatpush.msra.mxu0 0.0
    %683 = vmatpush.msra.mxu0 0.0
    %684 = vmatpush.msra.mxu0 0.0
    %685 = vmatpush.msra.mxu0 %v671
    %686 = vmatpush.msra.mxu0 %v670
    %687 = vmatpush.msra.mxu0 %v669
    %688 = vmatpush.msra.mxu0 %v668
    %689 = vmatpush.msra.mxu0 %v667
    %690 = vmatpush.msra.mxu0 %v666
    %691 = vmatpush.msra.mxu0 %v665
    %692 = vmatpush.msra.mxu0 %v664
    %693 = vmatmul.f32.gmra.mxu0 %v675
    %v694 = vpop.f32.mrf.mxu0
    %v695 = vadd.f32 %v673, %v694
    %696 = vdwg.mxu0
    %v697 = vld [vmem:[#allocation5 + $0x1e8] sm:$0xff]
    %v698 = vld [vmem:[#allocation5 + $0x1f0] sm:$0xff]
    %v699 = vld [vmem:[#allocation5 + $0x1f8] sm:$0xff]
    %v700 = vld [vmem:[#allocation5 + $0x200] sm:$0xff]
    %v701 = vld [vmem:[#allocation5 + $0x208] sm:$0xff]
    %v702 = vld [vmem:[#allocation5 + $0x210] sm:$0xff]
    %v703 = vld [vmem:[#allocation5 + $0x218] sm:$0xff]
    %v704 = vld [vmem:[#allocation5 + $0x220] sm:$0xff]
    %705 = vmatpush.msra.mxu0 0.0
    %706 = vmatpush.msra.mxu0 0.0
    %707 = vmatpush.msra.mxu0 0.0
    %708 = vmatpush.msra.mxu0 0.0
    %709 = vmatpush.msra.mxu0 0.0
    %710 = vmatpush.msra.mxu0 0.0
    %711 = vmatpush.msra.mxu0 0.0
    %712 = vmatpush.msra.mxu0 0.0
    %713 = vmatpush.msra.mxu0 %v704
    %714 = vmatpush.msra.mxu0 %v703
    %715 = vmatpush.msra.mxu0 %v702
    %716 = vmatpush.msra.mxu0 %v701
    %717 = vmatpush.msra.mxu0 %v700
    %718 = vmatpush.msra.mxu0 %v699
    %719 = vmatpush.msra.mxu0 %v698
    %720 = vmatpush.msra.mxu0 %v697
    %721 = vmatmul.f32.gmra.mxu0 %v675
    %v722 = vpop.f32.mrf.mxu0
    %v723 = vadd.f32 0.0, %v722
    %724 = vdwg.mxu0
    %v725 = vld [vmem:[#allocation5 + $0x228] sm:$0xff]
    %v726 = vld [vmem:[#allocation5 + $0x230] sm:$0xff]
    %v727 = vld [vmem:[#allocation5 + $0x238] sm:$0xff]
    %v728 = vld [vmem:[#allocation5 + $0x240] sm:$0xff]
    %v729 = vld [vmem:[#allocation5 + $0x248] sm:$0xff]
    %v730 = vld [vmem:[#allocation5 + $0x250] sm:$0xff]
    %v731 = vld [vmem:[#allocation5 + $0x258] sm:$0xff]
    %v732 = vld [vmem:[#allocation5 + $0x260] sm:$0xff]
    %733 = vmatpush.msra.mxu0 0.0
    %734 = vmatpush.msra.mxu0 0.0
    %735 = vmatpush.msra.mxu0 0.0
    %736 = vmatpush.msra.mxu0 0.0
    %737 = vmatpush.msra.mxu0 0.0
    %738 = vmatpush.msra.mxu0 0.0
    %739 = vmatpush.msra.mxu0 0.0
    %740 = vmatpush.msra.mxu0 0.0
    %741 = vmatpush.msra.mxu0 %v732
    %742 = vmatpush.msra.mxu0 %v731
    %743 = vmatpush.msra.mxu0 %v730
    %744 = vmatpush.msra.mxu0 %v729
    %745 = vmatpush.msra.mxu0 %v728
    %746 = vmatpush.msra.mxu0 %v727
    %747 = vmatpush.msra.mxu0 %v726
    %748 = vmatpush.msra.mxu0 %v725
    %749 = vmatmul.f32.gmra.mxu0 %v675
    %v750 = vpop.f32.mrf.mxu0
    %v751 = vadd.f32 0.0, %v750
    %752 = vdwg.mxu0
    %v753 = vld [vmem:[#allocation7 + $0xb] sm:$0x1]
    %755 = vrot.lane.b32.xlu0 %v695, 64
    %v756 = vpop.permute.xlu0 %755
    %v757 = vsel %vm213, %v695, 0
    %v759 = vsel %vm213, %v756, 0
    %761 = vmatpush.xpose.msra.mxu0 0.0
    %762 = vmatpush.xpose.msra.mxu0 0.0
    %763 = vmatpush.xpose.msra.mxu0 0.0
    %764 = vmatpush.xpose.msra.mxu0 0.0
    %765 = vmatpush.xpose.msra.mxu0 0.0
    %766 = vmatpush.xpose.msra.mxu0 0.0
    %767 = vmatpush.xpose.msra.mxu0 0.0
    %768 = vmatpush.xpose.msra.mxu0 0.0
    %769 = vmatpush.xpose.msra.mxu0 0.0
    %770 = vmatpush.xpose.msra.mxu0 0.0
    %771 = vmatpush.xpose.msra.mxu0 0.0
    %772 = vmatpush.xpose.msra.mxu0 0.0
    %773 = vmatpush.xpose.msra.mxu0 0.0
    %774 = vmatpush.xpose.msra.mxu0 0.0
    %775 = vmatpush.xpose.msra.mxu0 0.0
    %776 = vmatpush.xpose.msra.mxu0 %v759
    %777 = vmatmul.f32.gmra.mxu0 %v757
    %v778 = vpop.f32.mrf.mxu0
    %v779 = vadd.f32 0.0, %v778
    %780 = vdwg.mxu0
    %v781 = vsel %vm64, %v779, -inf
    %782 = vmax.xlane.f32.xlu0 %v781
    %v783 = vpop.xlane.xlu0 %782
    %v784 = vsub.f32 %v779, %v783
    %v785 = vmul.f32 %v784, 1.442695
    %v786 = vpow.pop %v785
    %v787 = vsel %vm64, %v786, 0.0
    %788 = vadd.xlane.f32.xlu0 %v787
    %v789 = vpop.xlane.xlu0 %788
    %v790 = vrcp.pop %v789
    %v791 = vmul.f32 %v789, %v790
    %v792 = vsub.f32 1.0, %v791
    %v793 = vmul.f32 %v790, %v792
    %v794 = vadd.f32 %v790, %v793
    %vm795 = vweird.f32 %v789
    %vm796 = vweird.f32 %v790
    %vm797 = vmor %vm795, %vm796
    %v798 = vsel %vm797, %v790, %v794
    %v799 = vand.u32 2147483647, %v789
    %vm800 = vcmp.eq.f32.partialorder %v799, 8.507059e+37
    %v801 = vand.u32 %v789, 2147483648
    %v802 = vor.u32 1.1754944e-38, %v801
    %v803 = vsel %vm800, %v802, %v798
    %v804 = vmul.f32 %v786, %v803
    %v806 = vsel %vm64, %v804, 0
    %808 = vmatpush.msra.mxu0 0.0
    %809 = vmatpush.msra.mxu0 0.0
    %810 = vmatpush.msra.mxu0 0.0
    %811 = vmatpush.msra.mxu0 0.0
    %812 = vmatpush.msra.mxu0 0.0
    %813 = vmatpush.msra.mxu0 0.0
    %814 = vmatpush.msra.mxu0 0.0
    %815 = vmatpush.msra.mxu0 0.0
    %816 = vmatpush.msra.mxu0 0.0
    %817 = vmatpush.msra.mxu0 0.0
    %818 = vmatpush.msra.mxu0 0.0
    %819 = vmatpush.msra.mxu0 0.0
    %820 = vmatpush.msra.mxu0 0.0
    %821 = vmatpush.msra.mxu0 0.0
    %822 = vmatpush.msra.mxu0 0.0
    %823 = vmatpush.msra.mxu0 %v723
    %824 = vmatmul.f32.gmra.mxu0 %v806
    %v825 = vpop.f32.mrf.mxu0
    %v826 = vadd.f32 0.0, %v825
    %827 = vdwg.mxu0
    %v828 = vperm.slane %v753, 0
    %v829 = vadd.f32 %v828, %v826
    %830 = vrot.lane.b32.xlu0 %v695, 112
    %v831 = vpop.permute.xlu0 %830
    %832 = vrot.lane.b32.xlu0 %v695, 48
    %v833 = vpop.permute.xlu0 %832
    %v834 = vsel %vm213, %v831, 0
    %v836 = vsel %vm213, %v833, 0
    %838 = vmatpush.xpose.msra.mxu0 0.0
    %839 = vmatpush.xpose.msra.mxu0 0.0
    %840 = vmatpush.xpose.msra.mxu0 0.0
    %841 = vmatpush.xpose.msra.mxu0 0.0
    %842 = vmatpush.xpose.msra.mxu0 0.0
    %843 = vmatpush.xpose.msra.mxu0 0.0
    %844 = vmatpush.xpose.msra.mxu0 0.0
    %845 = vmatpush.xpose.msra.mxu0 0.0
    %846 = vmatpush.xpose.msra.mxu0 0.0
    %847 = vmatpush.xpose.msra.mxu0 0.0
    %848 = vmatpush.xpose.msra.mxu0 0.0
    %849 = vmatpush.xpose.msra.mxu0 0.0
    %850 = vmatpush.xpose.msra.mxu0 0.0
    %851 = vmatpush.xpose.msra.mxu0 0.0
    %852 = vmatpush.xpose.msra.mxu0 0.0
    %853 = vmatpush.xpose.msra.mxu0 %v836
    %854 = vmatmul.f32.gmra.mxu0 %v834
    %v855 = vpop.f32.mrf.mxu0
    %v856 = vadd.f32 0.0, %v855
    %857 = vdwg.mxu0
    %v858 = vsel %vm64, %v856, -inf
    %859 = vmax.xlane.f32.xlu0 %v858
    %v860 = vpop.xlane.xlu0 %859
    %v861 = vsub.f32 %v856, %v860
    %v862 = vmul.f32 %v861, 1.442695
    %v863 = vpow.pop %v862
    %v864 = vsel %vm64, %v863, 0.0
    %865 = vadd.xlane.f32.xlu0 %v864
    %v866 = vpop.xlane.xlu0 %865
    %v867 = vrcp.pop %v866
    %v868 = vmul.f32 %v866, %v867
    %v869 = vsub.f32 1.0, %v868
    %v870 = vmul.f32 %v867, %v869
    %v871 = vadd.f32 %v867, %v870
    %vm872 = vweird.f32 %v866
    %vm873 = vweird.f32 %v867
    %vm874 = vmor %vm872, %vm873
    %v875 = vsel %vm874, %v867, %v871
    %v876 = vand.u32 2147483647, %v866
    %vm877 = vcmp.eq.f32.partialorder %v876, 8.507059e+37
    %v878 = vand.u32 %v866, 2147483648
    %v879 = vor.u32 1.1754944e-38, %v878
    %v880 = vsel %vm877, %v879, %v875
    %v881 = vmul.f32 %v863, %v880
    %883 = vrot.lane.b32.xlu0 %v723, 64
    %v884 = vpop.permute.xlu0 %883
    %v887 = vsel %vm64, %v881, 0
    %889 = vmatpush.msra.mxu0 0.0
    %890 = vmatpush.msra.mxu0 0.0
    %891 = vmatpush.msra.mxu0 0.0
    %892 = vmatpush.msra.mxu0 0.0
    %893 = vmatpush.msra.mxu0 0.0
    %894 = vmatpush.msra.mxu0 0.0
    %895 = vmatpush.msra.mxu0 0.0
    %896 = vmatpush.msra.mxu0 0.0
    %897 = vmatpush.msra.mxu0 0.0
    %898 = vmatpush.msra.mxu0 0.0
    %899 = vmatpush.msra.mxu0 0.0
    %900 = vmatpush.msra.mxu0 0.0
    %901 = vmatpush.msra.mxu0 0.0
    %902 = vmatpush.msra.mxu0 0.0
    %903 = vmatpush.msra.mxu0 0.0
    %904 = vmatpush.msra.mxu0 %v884
    %905 = vmatmul.f32.gmra.mxu0 %v887
    %v906 = vpop.f32.mrf.mxu0
    %v907 = vadd.f32 0.0, %v906
    %908 = vdwg.mxu0
    %v909 = vadd.f32 %v829, %v907
    %910 = vrot.lane.b32.xlu0 %v695, 96
    %v911 = vpop.permute.xlu0 %910
    %912 = vrot.lane.b32.xlu0 %v695, 32
    %v913 = vpop.permute.xlu0 %912
    %v914 = vsel %vm213, %v911, 0
    %v916 = vsel %vm213, %v913, 0
    %918 = vmatpush.xpose.msra.mxu0 0.0
    %919 = vmatpush.xpose.msra.mxu0 0.0
    %920 = vmatpush.xpose.msra.mxu0 0.0
    %921 = vmatpush.xpose.msra.mxu0 0.0
    %922 = vmatpush.xpose.msra.mxu0 0.0
    %923 = vmatpush.xpose.msra.mxu0 0.0
    %924 = vmatpush.xpose.msra.mxu0 0.0
    %925 = vmatpush.xpose.msra.mxu0 0.0
    %926 = vmatpush.xpose.msra.mxu0 0.0
    %927 = vmatpush.xpose.msra.mxu0 0.0
    %928 = vmatpush.xpose.msra.mxu0 0.0
    %929 = vmatpush.xpose.msra.mxu0 0.0
    %930 = vmatpush.xpose.msra.mxu0 0.0
    %931 = vmatpush.xpose.msra.mxu0 0.0
    %932 = vmatpush.xpose.msra.mxu0 0.0
    %933 = vmatpush.xpose.msra.mxu0 %v916
    %934 = vmatmul.f32.gmra.mxu0 %v914
    %v935 = vpop.f32.mrf.mxu0
    %v936 = vadd.f32 0.0, %v935
    %937 = vdwg.mxu0
    %v938 = vsel %vm64, %v936, -inf
    %939 = vmax.xlane.f32.xlu0 %v938
    %v940 = vpop.xlane.xlu0 %939
    %v941 = vsub.f32 %v936, %v940
    %v942 = vmul.f32 %v941, 1.442695
    %v943 = vpow.pop %v942
    %v944 = vsel %vm64, %v943, 0.0
    %945 = vadd.xlane.f32.xlu0 %v944
    %v946 = vpop.xlane.xlu0 %945
    %v947 = vrcp.pop %v946
    %v948 = vmul.f32 %v946, %v947
    %v949 = vsub.f32 1.0, %v948
    %v950 = vmul.f32 %v947, %v949
    %v951 = vadd.f32 %v947, %v950
    %vm952 = vweird.f32 %v946
    %vm953 = vweird.f32 %v947
    %vm954 = vmor %vm952, %vm953
    %v955 = vsel %vm954, %v947, %v951
    %v956 = vand.u32 2147483647, %v946
    %vm957 = vcmp.eq.f32.partialorder %v956, 8.507059e+37
    %v958 = vand.u32 %v946, 2147483648
    %v959 = vor.u32 1.1754944e-38, %v958
    %v960 = vsel %vm957, %v959, %v955
    %v961 = vmul.f32 %v943, %v960
    %v963 = vsel %vm64, %v961, 0
    %965 = vmatpush.msra.mxu0 0.0
    %966 = vmatpush.msra.mxu0 0.0
    %967 = vmatpush.msra.mxu0 0.0
    %968 = vmatpush.msra.mxu0 0.0
    %969 = vmatpush.msra.mxu0 0.0
    %970 = vmatpush.msra.mxu0 0.0
    %971 = vmatpush.msra.mxu0 0.0
    %972 = vmatpush.msra.mxu0 0.0
    %973 = vmatpush.msra.mxu0 0.0
    %974 = vmatpush.msra.mxu0 0.0
    %975 = vmatpush.msra.mxu0 0.0
    %976 = vmatpush.msra.mxu0 0.0
    %977 = vmatpush.msra.mxu0 0.0
    %978 = vmatpush.msra.mxu0 0.0
    %979 = vmatpush.msra.mxu0 0.0
    %980 = vmatpush.msra.mxu0 %v751
    %981 = vmatmul.f32.gmra.mxu0 %v963
    %v982 = vpop.f32.mrf.mxu0
    %v983 = vadd.f32 0.0, %v982
    %984 = vdwg.mxu0
    %v985 = vadd.f32 %v909, %v983
    %986 = vrot.lane.b32.xlu0 %v695, 80
    %v987 = vpop.permute.xlu0 %986
    %988 = vrot.lane.b32.xlu0 %v695, 16
    %v989 = vpop.permute.xlu0 %988
    %v990 = vsel %vm213, %v987, 0
    %v992 = vsel %vm213, %v989, 0
    %994 = vmatpush.xpose.msra.mxu0 0.0
    %995 = vmatpush.xpose.msra.mxu0 0.0
    %996 = vmatpush.xpose.msra.mxu0 0.0
    %997 = vmatpush.xpose.msra.mxu0 0.0
    %998 = vmatpush.xpose.msra.mxu0 0.0
    %999 = vmatpush.xpose.msra.mxu0 0.0
    %1000 = vmatpush.xpose.msra.mxu0 0.0
    %1001 = vmatpush.xpose.msra.mxu0 0.0
    %1002 = vmatpush.xpose.msra.mxu0 0.0
    %1003 = vmatpush.xpose.msra.mxu0 0.0
    %1004 = vmatpush.xpose.msra.mxu0 0.0
    %1005 = vmatpush.xpose.msra.mxu0 0.0
    %1006 = vmatpush.xpose.msra.mxu0 0.0
    %1007 = vmatpush.xpose.msra.mxu0 0.0
    %1008 = vmatpush.xpose.msra.mxu0 0.0
    %1009 = vmatpush.xpose.msra.mxu0 %v992
    %1010 = vmatmul.f32.gmra.mxu0 %v990
    %v1011 = vpop.f32.mrf.mxu0
    %v1012 = vadd.f32 0.0, %v1011
    %1013 = vdwg.mxu0
    %v1014 = vsel %vm64, %v1012, -inf
    %1015 = vmax.xlane.f32.xlu0 %v1014
    %v1016 = vpop.xlane.xlu0 %1015
    %v1017 = vsub.f32 %v1012, %v1016
    %v1018 = vmul.f32 %v1017, 1.442695
    %v1019 = vpow.pop %v1018
    %v1020 = vsel %vm64, %v1019, 0.0
    %1021 = vadd.xlane.f32.xlu0 %v1020
    %v1022 = vpop.xlane.xlu0 %1021
    %v1023 = vrcp.pop %v1022
    %v1024 = vmul.f32 %v1022, %v1023
    %v1025 = vsub.f32 1.0, %v1024
    %v1026 = vmul.f32 %v1023, %v1025
    %v1027 = vadd.f32 %v1023, %v1026
    %vm1028 = vweird.f32 %v1022
    %vm1029 = vweird.f32 %v1023
    %vm1030 = vmor %vm1028, %vm1029
    %v1031 = vsel %vm1030, %v1023, %v1027
    %v1032 = vand.u32 2147483647, %v1022
    %vm1033 = vcmp.eq.f32.partialorder %v1032, 8.507059e+37
    %v1034 = vand.u32 %v1022, 2147483648
    %v1035 = vor.u32 1.1754944e-38, %v1034
    %v1036 = vsel %vm1033, %v1035, %v1031
    %v1037 = vmul.f32 %v1019, %v1036
    %1039 = vrot.lane.b32.xlu0 %v751, 64
    %v1040 = vpop.permute.xlu0 %1039
    %v1043 = vsel %vm64, %v1037, 0
    %1045 = vmatpush.msra.mxu0 0.0
    %1046 = vmatpush.msra.mxu0 0.0
    %1047 = vmatpush.msra.mxu0 0.0
    %1048 = vmatpush.msra.mxu0 0.0
    %1049 = vmatpush.msra.mxu0 0.0
    %1050 = vmatpush.msra.mxu0 0.0
    %1051 = vmatpush.msra.mxu0 0.0
    %1052 = vmatpush.msra.mxu0 0.0
    %1053 = vmatpush.msra.mxu0 0.0
    %1054 = vmatpush.msra.mxu0 0.0
    %1055 = vmatpush.msra.mxu0 0.0
    %1056 = vmatpush.msra.mxu0 0.0
    %1057 = vmatpush.msra.mxu0 0.0
    %1058 = vmatpush.msra.mxu0 0.0
    %1059 = vmatpush.msra.mxu0 0.0
    %1060 = vmatpush.msra.mxu0 %v1040
    %1061 = vmatmul.f32.gmra.mxu0 %v1043
    %v1062 = vpop.f32.mrf.mxu0
    %v1063 = vadd.f32 0.0, %v1062
    %1064 = vdwg.mxu0
    %v1065 = vadd.f32 %v985, %v1063
    %v1066 = vadd.f32 %v663, %v1065
    %v1067 = vld [vmem:[#allocation7 + $0xc] sm:$0x1]
    %v1068 = vld [vmem:[#allocation7 + $0xd] sm:$0x1]
    %v1069 = vsel %vm129, %v1066, 0.0
    %1070 = vadd.xlane.f32.xlu0 %v1069
    %v1071 = vpop.xlane.xlu0 %1070
    %v1072 = vmul.f32 %v1071, %v535
    %v1073 = vmul.f32 %v1066, %v1066
    %v1074 = vsel %vm129, %v1073, 0.0
    %1075 = vadd.xlane.f32.xlu0 %v1074
    %v1076 = vpop.xlane.xlu0 %1075
    %v1077 = vmul.f32 %v1076, %v535
    %v1078 = vmul.f32 %v1072, %v1072
    %v1079 = vsub.f32 %v1077, %v1078
    %v1080 = vsub.f32 %v1066, %v1072
    %v1081 = vadd.f32 %v1079, 1e-05
    %v1082 = vrsqrt.pop %v1081
    %v1083 = vmul.f32 %v1082, %v1081
    %v1084 = vmul.f32 %v1083, %v1082
    %v1085 = vmul.f32 0.5, %v1084
    %v1086 = vsub.f32 1.5, %v1085
    %v1087 = vmul.f32 %v1082, %v1086
    %vm1088 = vweird.f32 %v1081
    %vm1089 = vweird.f32 %v1082
    %vm1090 = vmor %vm1088, %vm1089
    %v1091 = vsel %vm1090, %v1082, %v1087
    %v1092 = vmul.f32 %v1080, %v1091
    %v1093 = vperm.slane %v1067, 0
    %v1094 = vmul.f32 %v1092, %v1093
    %v1095 = vperm.slane %v1068, 0
    %v1096 = vadd.f32 %v1094, %v1095
    %v1097 = vld [vmem:[#allocation5 + $0x268] sm:$0xff]
    %v1098 = vld [vmem:[#allocation5 + $0x270] sm:$0xff]
    %v1099 = vld [vmem:[#allocation5 + $0x278] sm:$0xff]
    %v1100 = vld [vmem:[#allocation5 + $0x280] sm:$0xff]
    %v1101 = vld [vmem:[#allocation5 + $0x288] sm:$0xff]
    %v1102 = vld [vmem:[#allocation5 + $0x290] sm:$0xff]
    %v1103 = vld [vmem:[#allocation5 + $0x298] sm:$0xff]
    %v1104 = vld [vmem:[#allocation5 + $0x2a0] sm:$0xff]
    %v1105 = vld [vmem:[#allocation7 + $0xe] sm:$0x1]
    %v1106 = vperm.slane %v1105, 0
    %v1108 = vsel %vm129, %v1096, 0
    %1110 = vmatpush.msra.mxu0 0.0
    %1111 = vmatpush.msra.mxu0 0.0
    %1112 = vmatpush.msra.mxu0 0.0
    %1113 = vmatpush.msra.mxu0 0.0
    %1114 = vmatpush.msra.mxu0 0.0
    %1115 = vmatpush.msra.mxu0 0.0
    %1116 = vmatpush.msra.mxu0 0.0
    %1117 = vmatpush.msra.mxu0 0.0
    %1118 = vmatpush.msra.mxu0 %v1104
    %1119 = vmatpush.msra.mxu0 %v1103
    %1120 = vmatpush.msra.mxu0 %v1102
    %1121 = vmatpush.msra.mxu0 %v1101
    %1122 = vmatpush.msra.mxu0 %v1100
    %1123 = vmatpush.msra.mxu0 %v1099
    %1124 = vmatpush.msra.mxu0 %v1098
    %1125 = vmatpush.msra.mxu0 %v1097
    %1126 = vmatmul.f32.gmra.mxu0 %v1108
    %v1127 = vpop.f32.mrf.mxu0
    %v1128 = vadd.f32 %v1106, %v1127
    %1129 = vdwg.mxu0
    %v1130 = vmax.f32 %v1128, 0.0
    %v1131 = vld [vmem:[#allocation5 + $0x2a8] sm:$0xff]
    %v1132 = vld [vmem:[#allocation5 + $0x2b0] sm:$0xff]
    %v1133 = vld [vmem:[#allocation5 + $0x2b8] sm:$0xff]
    %v1134 = vld [vmem:[#allocation5 + $0x2c0] sm:$0xff]
    %v1135 = vld [vmem:[#allocation5 + $0x2c8] sm:$0xff]
    %v1136 = vld [vmem:[#allocation5 + $0x2d0] sm:$0xff]
    %v1137 = vld [vmem:[#allocation5 + $0x2d8] sm:$0xff]
    %v1138 = vld [vmem:[#allocation5 + $0x2e0] sm:$0xff]
    %v1139 = vld [vmem:[#allocation5 + $0x2e8] sm:$0xff]
    %v1140 = vld [vmem:[#allocation5 + $0x2f0] sm:$0xff]
    %v1141 = vld [vmem:[#allocation5 + $0x2f8] sm:$0xff]
    %v1142 = vld [vmem:[#allocation5 + $0x300] sm:$0xff]
    %v1143 = vld [vmem:[#allocation5 + $0x308] sm:$0xff]
    %v1144 = vld [vmem:[#allocation5 + $0x310] sm:$0xff]
    %v1145 = vld [vmem:[#allocation5 + $0x318] sm:$0xff]
    %v1146 = vld [vmem:[#allocation5 + $0x320] sm:$0xff]
    %v1147 = vld [vmem:[#allocation7 + $0xf] sm:$0x1]
    %v1148 = vperm.slane %v1147, 0
    %1149 = vmatpush.msra.mxu0 %v1146
    %1150 = vmatpush.msra.mxu0 %v1145
    %1151 = vmatpush.msra.mxu0 %v1144
    %1152 = vmatpush.msra.mxu0 %v1143
    %1153 = vmatpush.msra.mxu0 %v1142
    %1154 = vmatpush.msra.mxu0 %v1141
    %1155 = vmatpush.msra.mxu0 %v1140
    %1156 = vmatpush.msra.mxu0 %v1139
    %1157 = vmatpush.msra.mxu0 %v1138
    %1158 = vmatpush.msra.mxu0 %v1137
    %1159 = vmatpush.msra.mxu0 %v1136
    %1160 = vmatpush.msra.mxu0 %v1135
    %1161 = vmatpush.msra.mxu0 %v1134
    %1162 = vmatpush.msra.mxu0 %v1133
    %1163 = vmatpush.msra.mxu0 %v1132
    %1164 = vmatpush.msra.mxu0 %v1131
    %1165 = vmatmul.f32.gmra.mxu0 %v1130
    %v1166 = vpop.f32.mrf.mxu0
    %v1167 = vadd.f32 %v1148, %v1166
    %1168 = vdwg.mxu0
    %v1169 = vadd.f32 %v1096, %v1167
    %v1170 = vld [vmem:[#allocation7 + $0x10] sm:$0x1]
    %v1171 = vld [vmem:[#allocation7 + $0x11] sm:$0x1]
    %v1172 = vsel %vm129, %v1169, 0.0
    %1173 = vadd.xlane.f32.xlu0 %v1172
    %v1174 = vpop.xlane.xlu0 %1173
    %v1175 = vmul.f32 %v1174, %v535
    %v1176 = vmul.f32 %v1169, %v1169
    %v1177 = vsel %vm129, %v1176, 0.0
    %1178 = vadd.xlane.f32.xlu0 %v1177
    %v1179 = vpop.xlane.xlu0 %1178
    %v1180 = vmul.f32 %v1179, %v535
    %v1181 = vmul.f32 %v1175, %v1175
    %v1182 = vsub.f32 %v1180, %v1181
    %v1183 = vsub.f32 %v1169, %v1175
    %v1184 = vadd.f32 %v1182, 1e-05
    %v1185 = vrsqrt.pop %v1184
    %v1186 = vmul.f32 %v1185, %v1184
    %v1187 = vmul.f32 %v1186, %v1185
    %v1188 = vmul.f32 0.5, %v1187
    %v1189 = vsub.f32 1.5, %v1188
    %v1190 = vmul.f32 %v1185, %v1189
    %vm1191 = vweird.f32 %v1184
    %vm1192 = vweird.f32 %v1185
    %vm1193 = vmor %vm1191, %vm1192
    %v1194 = vsel %vm1193, %v1185, %v1190
    %v1195 = vmul.f32 %v1183, %v1194
    %v1196 = vperm.slane %v1170, 0
    %v1197 = vmul.f32 %v1195, %v1196
    %v1198 = vperm.slane %v1171, 0
    %v1199 = vadd.f32 %v1197, %v1198
    %v1200 = vld [vmem:[#allocation5 + $0x328] sm:$0xff]
    %v1201 = vld [vmem:[#allocation5 + $0x330] sm:$0xff]
    %v1202 = vld [vmem:[#allocation5 + $0x338] sm:$0xff]
    %v1203 = vld [vmem:[#allocation5 + $0x340] sm:$0xff]
    %v1204 = vld [vmem:[#allocation5 + $0x348] sm:$0xff]
    %v1205 = vld [vmem:[#allocation5 + $0x350] sm:$0xff]
    %v1206 = vld [vmem:[#allocation5 + $0x358] sm:$0xff]
    %v1207 = vld [vmem:[#allocation5 + $0x360] sm:$0xff]
    %v1208 = vld [vmem:[#allocation7 + $0x12] sm:$0x1]
    %v1209 = vperm.slane %v1208, 0
    %v1211 = vsel %vm129, %v1199, 0
    %1213 = vmatpush.msra.mxu0 0.0
    %1214 = vmatpush.msra.mxu0 0.0
    %1215 = vmatpush.msra.mxu0 0.0
    %1216 = vmatpush.msra.mxu0 0.0
    %1217 = vmatpush.msra.mxu0 0.0
    %1218 = vmatpush.msra.mxu0 0.0
    %1219 = vmatpush.msra.mxu0 0.0
    %1220 = vmatpush.msra.mxu0 0.0
    %1221 = vmatpush.msra.mxu0 %v1207
    %1222 = vmatpush.msra.mxu0 %v1206
    %1223 = vmatpush.msra.mxu0 %v1205
    %1224 = vmatpush.msra.mxu0 %v1204
    %1225 = vmatpush.msra.mxu0 %v1203
    %1226 = vmatpush.msra.mxu0 %v1202
    %1227 = vmatpush.msra.mxu0 %v1201
    %1228 = vmatpush.msra.mxu0 %v1200
    %1229 = vmatmul.f32.gmra.mxu0 %v1211
    %v1230 = vpop.f32.mrf.mxu0
    %v1231 = vadd.f32 %v1209, %v1230
    %1232 = vdwg.mxu0
    %v1233 = vld [vmem:[#allocation5 + $0x368] sm:$0xff]
    %v1234 = vld [vmem:[#allocation5 + $0x370] sm:$0xff]
    %v1235 = vld [vmem:[#allocation5 + $0x378] sm:$0xff]
    %v1236 = vld [vmem:[#allocation5 + $0x380] sm:$0xff]
    %v1237 = vld [vmem:[#allocation5 + $0x388] sm:$0xff]
    %v1238 = vld [vmem:[#allocation5 + $0x390] sm:$0xff]
    %v1239 = vld [vmem:[#allocation5 + $0x398] sm:$0xff]
    %v1240 = vld [vmem:[#allocation5 + $0x3a0] sm:$0xff]
    %1241 = vmatpush.msra.mxu0 0.0
    %1242 = vmatpush.msra.mxu0 0.0
    %1243 = vmatpush.msra.mxu0 0.0
    %1244 = vmatpush.msra.mxu0 0.0
    %1245 = vmatpush.msra.mxu0 0.0
    %1246 = vmatpush.msra.mxu0 0.0
    %1247 = vmatpush.msra.mxu0 0.0
    %1248 = vmatpush.msra.mxu0 0.0
    %1249 = vmatpush.msra.mxu0 %v1240
    %1250 = vmatpush.msra.mxu0 %v1239
    %1251 = vmatpush.msra.mxu0 %v1238
    %1252 = vmatpush.msra.mxu0 %v1237
    %1253 = vmatpush.msra.mxu0 %v1236
    %1254 = vmatpush.msra.mxu0 %v1235
    %1255 = vmatpush.msra.mxu0 %v1234
    %1256 = vmatpush.msra.mxu0 %v1233
    %1257 = vmatmul.f32.gmra.mxu0 %v1211
    %v1258 = vpop.f32.mrf.mxu0
    %v1259 = vadd.f32 0.0, %v1258
    %1260 = vdwg.mxu0
    %v1261 = vld [vmem:[#allocation5 + $0x3a8] sm:$0xff]
    %v1262 = vld [vmem:[#allocation5 + $0x3b0] sm:$0xff]
    %v1263 = vld [vmem:[#allocation5 + $0x3b8] sm:$0xff]
    %v1264 = vld [vmem:[#allocation5 + $0x3c0] sm:$0xff]
    %v1265 = vld [vmem:[#allocation5 + $0x3c8] sm:$0xff]
    %v1266 = vld [vmem:[#allocation5 + $0x3d0] sm:$0xff]
    %v1267 = vld [vmem:[#allocation5 + $0x3d8] sm:$0xff]
    %v1268 = vld [vmem:[#allocation5 + $0x3e0] sm:$0xff]
    %1269 = vmatpush.msra.mxu0 0.0
    %1270 = vmatpush.msra.mxu0 0.0
    %1271 = vmatpush.msra.mxu0 0.0
    %1272 = vmatpush.msra.mxu0 0.0
    %1273 = vmatpush.msra.mxu0 0.0
    %1274 = vmatpush.msra.mxu0 0.0
    %1275 = vmatpush.msra.mxu0 0.0
    %1276 = vmatpush.msra.mxu0 0.0
    %1277 = vmatpush.msra.mxu0 %v1268
    %1278 = vmatpush.msra.mxu0 %v1267
    %1279 = vmatpush.msra.mxu0 %v1266
    %1280 = vmatpush.msra.mxu0 %v1265
    %1281 = vmatpush.msra.mxu0 %v1264
    %1282 = vmatpush.msra.mxu0 %v1263
    %1283 = vmatpush.msra.mxu0 %v1262
    %1284 = vmatpush.msra.mxu0 %v1261
    %1285 = vmatmul.f32.gmra.mxu0 %v1211
    %v1286 = vpop.f32.mrf.mxu0
    %v1287 = vadd.f32 0.0, %v1286
    %1288 = vdwg.mxu0
    %v1289 = vld [vmem:[#allocation7 + $0x13] sm:$0x1]
    %1291 = vrot.lane.b32.xlu0 %v1231, 64
    %v1292 = vpop.permute.xlu0 %1291
    %v1293 = vsel %vm213, %v1231, 0
    %v1295 = vsel %vm213, %v1292, 0
    %1297 = vmatpush.xpose.msra.mxu0 0.0
    %1298 = vmatpush.xpose.msra.mxu0 0.0
    %1299 = vmatpush.xpose.msra.mxu0 0.0
    %1300 = vmatpush.xpose.msra.mxu0 0.0
    %1301 = vmatpush.xpose.msra.mxu0 0.0
    %1302 = vmatpush.xpose.msra.mxu0 0.0
    %1303 = vmatpush.xpose.msra.mxu0 0.0
    %1304 = vmatpush.xpose.msra.mxu0 0.0
    %1305 = vmatpush.xpose.msra.mxu0 0.0
    %1306 = vmatpush.xpose.msra.mxu0 0.0
    %1307 = vmatpush.xpose.msra.mxu0 0.0
    %1308 = vmatpush.xpose.msra.mxu0 0.0
    %1309 = vmatpush.xpose.msra.mxu0 0.0
    %1310 = vmatpush.xpose.msra.mxu0 0.0
    %1311 = vmatpush.xpose.msra.mxu0 0.0
    %1312 = vmatpush.xpose.msra.mxu0 %v1295
    %1313 = vmatmul.f32.gmra.mxu0 %v1293
    %v1314 = vpop.f32.mrf.mxu0
    %v1315 = vadd.f32 0.0, %v1314
    %1316 = vdwg.mxu0
    %v1317 = vsel %vm64, %v1315, -inf
    %1318 = vmax.xlane.f32.xlu0 %v1317
    %v1319 = vpop.xlane.xlu0 %1318
    %v1320 = vsub.f32 %v1315, %v1319
    %v1321 = vmul.f32 %v1320, 1.442695
    %v1322 = vpow.pop %v1321
    %v1323 = vsel %vm64, %v1322, 0.0
    %1324 = vadd.xlane.f32.xlu0 %v1323
    %v1325 = vpop.xlane.xlu0 %1324
    %v1326 = vrcp.pop %v1325
    %v1327 = vmul.f32 %v1325, %v1326
    %v1328 = vsub.f32 1.0, %v1327
    %v1329 = vmul.f32 %v1326, %v1328
    %v1330 = vadd.f32 %v1326, %v1329
    %vm1331 = vweird.f32 %v1325
    %vm1332 = vweird.f32 %v1326
    %vm1333 = vmor %vm1331, %vm1332
    %v1334 = vsel %vm1333, %v1326, %v1330
    %v1335 = vand.u32 2147483647, %v1325
    %vm1336 = vcmp.eq.f32.partialorder %v1335, 8.507059e+37
    %v1337 = vand.u32 %v1325, 2147483648
    %v1338 = vor.u32 1.1754944e-38, %v1337
    %v1339 = vsel %vm1336, %v1338, %v1334
    %v1340 = vmul.f32 %v1322, %v1339
    %v1342 = vsel %vm64, %v1340, 0
    %1344 = vmatpush.msra.mxu0 0.0
    %1345 = vmatpush.msra.mxu0 0.0
    %1346 = vmatpush.msra.mxu0 0.0
    %1347 = vmatpush.msra.mxu0 0.0
    %1348 = vmatpush.msra.mxu0 0.0
    %1349 = vmatpush.msra.mxu0 0.0
    %1350 = vmatpush.msra.mxu0 0.0
    %1351 = vmatpush.msra.mxu0 0.0
    %1352 = vmatpush.msra.mxu0 0.0
    %1353 = vmatpush.msra.mxu0 0.0
    %1354 = vmatpush.msra.mxu0 0.0
    %1355 = vmatpush.msra.mxu0 0.0
    %1356 = vmatpush.msra.mxu0 0.0
    %1357 = vmatpush.msra.mxu0 0.0
    %1358 = vmatpush.msra.mxu0 0.0
    %1359 = vmatpush.msra.mxu0 %v1259
    %1360 = vmatmul.f32.gmra.mxu0 %v1342
    %v1361 = vpop.f32.mrf.mxu0
    %v1362 = vadd.f32 0.0, %v1361
    %1363 = vdwg.mxu0
    %v1364 = vperm.slane %v1289, 0
    %v1365 = vadd.f32 %v1364, %v1362
    %1366 = vrot.lane.b32.xlu0 %v1231, 112
    %v1367 = vpop.permute.xlu0 %1366
    %1368 = vrot.lane.b32.xlu0 %v1231, 48
    %v1369 = vpop.permute.xlu0 %1368
    %v1370 = vsel %vm213, %v1367, 0
    %v1372 = vsel %vm213, %v1369, 0
    %1374 = vmatpush.xpose.msra.mxu0 0.0
    %1375 = vmatpush.xpose.msra.mxu0 0.0
    %1376 = vmatpush.xpose.msra.mxu0 0.0
    %1377 = vmatpush.xpose.msra.mxu0 0.0
    %1378 = vmatpush.xpose.msra.mxu0 0.0
    %1379 = vmatpush.xpose.msra.mxu0 0.0
    %1380 = vmatpush.xpose.msra.mxu0 0.0
    %1381 = vmatpush.xpose.msra.mxu0 0.0
    %1382 = vmatpush.xpose.msra.mxu0 0.0
    %1383 = vmatpush.xpose.msra.mxu0 0.0
    %1384 = vmatpush.xpose.msra.mxu0 0.0
    %1385 = vmatpush.xpose.msra.mxu0 0.0
    %1386 = vmatpush.xpose.msra.mxu0 0.0
    %1387 = vmatpush.xpose.msra.mxu0 0.0
    %1388 = vmatpush.xpose.msra.mxu0 0.0
    %1389 = vmatpush.xpose.msra.mxu0 %v1372
    %1390 = vmatmul.f32.gmra.mxu0 %v1370
    %v1391 = vpop.f32.mrf.mxu0
    %v1392 = vadd.f32 0.0, %v1391
    %1393 = vdwg.mxu0
    %v1394 = vsel %vm64, %v1392, -inf
    %1395 = vmax.xlane.f32.xlu0 %v1394
    %v1396 = vpop.xlane.xlu0 %1395
    %v1397 = vsub.f32 %v1392, %v1396
    %v1398 = vmul.f32 %v1397, 1.442695
    %v1399 = vpow.pop %v1398
    %v1400 = vsel %vm64, %v1399, 0.0
    %1401 = vadd.xlane.f32.xlu0 %v1400
    %v1402 = vpop.xlane.xlu0 %1401
    %v1403 = vrcp.pop %v1402
    %v1404 = vmul.f32 %v1402, %v1403
    %v1405 = vsub.f32 1.0, %v1404
    %v1406 = vmul.f32 %v1403, %v1405
    %v1407 = vadd.f32 %v1403, %v1406
    %vm1408 = vweird.f32 %v1402
    %vm1409 = vweird.f32 %v1403
    %vm1410 = vmor %vm1408, %vm1409
    %v1411 = vsel %vm1410, %v1403, %v1407
    %v1412 = vand.u32 2147483647, %v1402
    %vm1413 = vcmp.eq.f32.partialorder %v1412, 8.507059e+37
    %v1414 = vand.u32 %v1402, 2147483648
    %v1415 = vor.u32 1.1754944e-38, %v1414
    %v1416 = vsel %vm1413, %v1415, %v1411
    %v1417 = vmul.f32 %v1399, %v1416
    %1419 = vrot.lane.b32.xlu0 %v1259, 64
    %v1420 = vpop.permute.xlu0 %1419
    %v1423 = vsel %vm64, %v1417, 0
    %1425 = vmatpush.msra.mxu0 0.0
    %1426 = vmatpush.msra.mxu0 0.0
    %1427 = vmatpush.msra.mxu0 0.0
    %1428 = vmatpush.msra.mxu0 0.0
    %1429 = vmatpush.msra.mxu0 0.0
    %1430 = vmatpush.msra.mxu0 0.0
    %1431 = vmatpush.msra.mxu0 0.0
    %1432 = vmatpush.msra.mxu0 0.0
    %1433 = vmatpush.msra.mxu0 0.0
    %1434 = vmatpush.msra.mxu0 0.0
    %1435 = vmatpush.msra.mxu0 0.0
    %1436 = vmatpush.msra.mxu0 0.0
    %1437 = vmatpush.msra.mxu0 0.0
    %1438 = vmatpush.msra.mxu0 0.0
    %1439 = vmatpush.msra.mxu0 0.0
    %1440 = vmatpush.msra.mxu0 %v1420
    %1441 = vmatmul.f32.gmra.mxu0 %v1423
    %v1442 = vpop.f32.mrf.mxu0
    %v1443 = vadd.f32 0.0, %v1442
    %1444 = vdwg.mxu0
    %v1445 = vadd.f32 %v1365, %v1443
    %1446 = vrot.lane.b32.xlu0 %v1231, 96
    %v1447 = vpop.permute.xlu0 %1446
    %1448 = vrot.lane.b32.xlu0 %v1231, 32
    %v1449 = vpop.permute.xlu0 %1448
    %v1450 = vsel %vm213, %v1447, 0
    %v1452 = vsel %vm213, %v1449, 0
    %1454 = vmatpush.xpose.msra.mxu0 0.0
    %1455 = vmatpush.xpose.msra.mxu0 0.0
    %1456 = vmatpush.xpose.msra.mxu0 0.0
    %1457 = vmatpush.xpose.msra.mxu0 0.0
    %1458 = vmatpush.xpose.msra.mxu0 0.0
    %1459 = vmatpush.xpose.msra.mxu0 0.0
    %1460 = vmatpush.xpose.msra.mxu0 0.0
    %1461 = vmatpush.xpose.msra.mxu0 0.0
    %1462 = vmatpush.xpose.msra.mxu0 0.0
    %1463 = vmatpush.xpose.msra.mxu0 0.0
    %1464 = vmatpush.xpose.msra.mxu0 0.0
    %1465 = vmatpush.xpose.msra.mxu0 0.0
    %1466 = vmatpush.xpose.msra.mxu0 0.0
    %1467 = vmatpush.xpose.msra.mxu0 0.0
    %1468 = vmatpush.xpose.msra.mxu0 0.0
    %1469 = vmatpush.xpose.msra.mxu0 %v1452
    %1470 = vmatmul.f32.gmra.mxu0 %v1450
    %v1471 = vpop.f32.mrf.mxu0
    %v1472 = vadd.f32 0.0, %v1471
    %1473 = vdwg.mxu0
    %v1474 = vsel %vm64, %v1472, -inf
    %1475 = vmax.xlane.f32.xlu0 %v1474
    %v1476 = vpop.xlane.xlu0 %1475
    %v1477 = vsub.f32 %v1472, %v1476
    %v1478 = vmul.f32 %v1477, 1.442695
    %v1479 = vpow.pop %v1478
    %v1480 = vsel %vm64, %v1479, 0.0
    %1481 = vadd.xlane.f32.xlu0 %v1480
    %v1482 = vpop.xlane.xlu0 %1481
    %v1483 = vrcp.pop %v1482
    %v1484 = vmul.f32 %v1482, %v1483
    %v1485 = vsub.f32 1.0, %v1484
    %v1486 = vmul.f32 %v1483, %v1485
    %v1487 = vadd.f32 %v1483, %v1486
    %vm1488 = vweird.f32 %v1482
    %vm1489 = vweird.f32 %v1483
    %vm1490 = vmor %vm1488, %vm1489
    %v1491 = vsel %vm1490, %v1483, %v1487
    %v1492 = vand.u32 2147483647, %v1482
    %vm1493 = vcmp.eq.f32.partialorder %v1492, 8.507059e+37
    %v1494 = vand.u32 %v1482, 2147483648
    %v1495 = vor.u32 1.1754944e-38, %v1494
    %v1496 = vsel %vm1493, %v1495, %v1491
    %v1497 = vmul.f32 %v1479, %v1496
    %v1499 = vsel %vm64, %v1497, 0
    %1501 = vmatpush.msra.mxu0 0.0
    %1502 = vmatpush.msra.mxu0 0.0
    %1503 = vmatpush.msra.mxu0 0.0
    %1504 = vmatpush.msra.mxu0 0.0
    %1505 = vmatpush.msra.mxu0 0.0
    %1506 = vmatpush.msra.mxu0 0.0
    %1507 = vmatpush.msra.mxu0 0.0
    %1508 = vmatpush.msra.mxu0 0.0
    %1509 = vmatpush.msra.mxu0 0.0
    %1510 = vmatpush.msra.mxu0 0.0
    %1511 = vmatpush.msra.mxu0 0.0
    %1512 = vmatpush.msra.mxu0 0.0
    %1513 = vmatpush.msra.mxu0 0.0
    %1514 = vmatpush.msra.mxu0 0.0
    %1515 = vmatpush.msra.mxu0 0.0
    %1516 = vmatpush.msra.mxu0 %v1287
    %1517 = vmatmul.f32.gmra.mxu0 %v1499
    %v1518 = vpop.f32.mrf.mxu0
    %v1519 = vadd.f32 0.0, %v1518
    %1520 = vdwg.mxu0
    %v1521 = vadd.f32 %v1445, %v1519
    %1522 = vrot.lane.b32.xlu0 %v1231, 80
    %v1523 = vpop.permute.xlu0 %1522
    %1524 = vrot.lane.b32.xlu0 %v1231, 16
    %v1525 = vpop.permute.xlu0 %1524
    %v1526 = vsel %vm213, %v1523, 0
    %v1528 = vsel %vm213, %v1525, 0
    %1530 = vmatpush.xpose.msra.mxu0 0.0
    %1531 = vmatpush.xpose.msra.mxu0 0.0
    %1532 = vmatpush.xpose.msra.mxu0 0.0
    %1533 = vmatpush.xpose.msra.mxu0 0.0
    %1534 = vmatpush.xpose.msra.mxu0 0.0
    %1535 = vmatpush.xpose.msra.mxu0 0.0
    %1536 = vmatpush.xpose.msra.mxu0 0.0
    %1537 = vmatpush.xpose.msra.mxu0 0.0
    %1538 = vmatpush.xpose.msra.mxu0 0.0
    %1539 = vmatpush.xpose.msra.mxu0 0.0
    %1540 = vmatpush.xpose.msra.mxu0 0.0
    %1541 = vmatpush.xpose.msra.mxu0 0.0
    %1542 = vmatpush.xpose.msra.mxu0 0.0
    %1543 = vmatpush.xpose.msra.mxu0 0.0
    %1544 = vmatpush.xpose.msra.mxu0 0.0
    %1545 = vmatpush.xpose.msra.mxu0 %v1528
    %1546 = vmatmul.f32.gmra.mxu0 %v1526
    %v1547 = vpop.f32.mrf.mxu0
    %v1548 = vadd.f32 0.0, %v1547
    %1549 = vdwg.mxu0
    %v1550 = vsel %vm64, %v1548, -inf
    %1551 = vmax.xlane.f32.xlu0 %v1550
    %v1552 = vpop.xlane.xlu0 %1551
    %v1553 = vsub.f32 %v1548, %v1552
    %v1554 = vmul.f32 %v1553, 1.442695
    %v1555 = vpow.pop %v1554
    %v1556 = vsel %vm64, %v1555, 0.0
    %1557 = vadd.xlane.f32.xlu0 %v1556
    %v1558 = vpop.xlane.xlu0 %1557
    %v1559 = vrcp.pop %v1558
    %v1560 = vmul.f32 %v1558, %v1559
    %v1561 = vsub.f32 1.0, %v1560
    %v1562 = vmul.f32 %v1559, %v1561
    %v1563 = vadd.f32 %v1559, %v1562
    %vm1564 = vweird.f32 %v1558
    %vm1565 = vweird.f32 %v1559
    %vm1566 = vmor %vm1564, %vm1565
    %v1567 = vsel %vm1566, %v1559, %v1563
    %v1568 = vand.u32 2147483647, %v1558
    %vm1569 = vcmp.eq.f32.partialorder %v1568, 8.507059e+37
    %v1570 = vand.u32 %v1558, 2147483648
    %v1571 = vor.u32 1.1754944e-38, %v1570
    %v1572 = vsel %vm1569, %v1571, %v1567
    %v1573 = vmul.f32 %v1555, %v1572
    %1575 = vrot.lane.b32.xlu0 %v1287, 64
    %v1576 = vpop.permute.xlu0 %1575
    %v1579 = vsel %vm64, %v1573, 0
    %1581 = vmatpush.msra.mxu0 0.0
    %1582 = vmatpush.msra.mxu0 0.0
    %1583 = vmatpush.msra.mxu0 0.0
    %1584 = vmatpush.msra.mxu0 0.0
    %1585 = vmatpush.msra.mxu0 0.0
    %1586 = vmatpush.msra.mxu0 0.0
    %1587 = vmatpush.msra.mxu0 0.0
    %1588 = vmatpush.msra.mxu0 0.0
    %1589 = vmatpush.msra.mxu0 0.0
    %1590 = vmatpush.msra.mxu0 0.0
    %1591 = vmatpush.msra.mxu0 0.0
    %1592 = vmatpush.msra.mxu0 0.0
    %1593 = vmatpush.msra.mxu0 0.0
    %1594 = vmatpush.msra.mxu0 0.0
    %1595 = vmatpush.msra.mxu0 0.0
    %1596 = vmatpush.msra.mxu0 %v1576
    %1597 = vmatmul.f32.gmra.mxu0 %v1579
    %v1598 = vpop.f32.mrf.mxu0
    %v1599 = vadd.f32 0.0, %v1598
    %1600 = vdwg.mxu0
    %v1601 = vadd.f32 %v1521, %v1599
    %v1602 = vadd.f32 %v1199, %v1601
    %v1603 = vld [vmem:[#allocation7 + $0x14] sm:$0x1]
    %v1604 = vld [vmem:[#allocation7 + $0x15] sm:$0x1]
    %v1605 = vsel %vm129, %v1602, 0.0
    %1606 = vadd.xlane.f32.xlu0 %v1605
    %v1607 = vpop.xlane.xlu0 %1606
    %v1608 = vmul.f32 %v1607, %v535
    %v1609 = vmul.f32 %v1602, %v1602
    %v1610 = vsel %vm129, %v1609, 0.0
    %1611 = vadd.xlane.f32.xlu0 %v1610
    %v1612 = vpop.xlane.xlu0 %1611
    %v1613 = vmul.f32 %v1612, %v535
    %v1614 = vmul.f32 %v1608, %v1608
    %v1615 = vsub.f32 %v1613, %v1614
    %v1616 = vsub.f32 %v1602, %v1608
    %v1617 = vadd.f32 %v1615, 1e-05
    %v1618 = vrsqrt.pop %v1617
    %v1619 = vmul.f32 %v1618, %v1617
    %v1620 = vmul.f32 %v1619, %v1618
    %v1621 = vmul.f32 0.5, %v1620
    %v1622 = vsub.f32 1.5, %v1621
    %v1623 = vmul.f32 %v1618, %v1622
    %vm1624 = vweird.f32 %v1617
    %vm1625 = vweird.f32 %v1618
    %vm1626 = vmor %vm1624, %vm1625
    %v1627 = vsel %vm1626, %v1618, %v1623
    %v1628 = vmul.f32 %v1616, %v1627
    %v1629 = vperm.slane %v1603, 0
    %v1630 = vmul.f32 %v1628, %v1629
    %v1631 = vperm.slane %v1604, 0
    %v1632 = vadd.f32 %v1630, %v1631
    %v1633 = vld [vmem:[#allocation5 + $0x3e8] sm:$0xff]
    %v1634 = vld [vmem:[#allocation5 + $0x3f0] sm:$0xff]
    %v1635 = vld [vmem:[#allocation5 + $0x3f8] sm:$0xff]
    %v1636 = vld [vmem:[#allocation5 + $0x400] sm:$0xff]
    %v1637 = vld [vmem:[#allocation5 + $0x408] sm:$0xff]
    %v1638 = vld [vmem:[#allocation5 + $0x410] sm:$0xff]
    %v1639 = vld [vmem:[#allocation5 + $0x418] sm:$0xff]
    %v1640 = vld [vmem:[#allocation5 + $0x420] sm:$0xff]
    %v1641 = vld [vmem:[#allocation7 + $0x16] sm:$0x1]
    %v1642 = vperm.slane %v1641, 0
    %v1644 = vsel %vm129, %v1632, 0
    %1646 = vmatpush.msra.mxu0 0.0
    %1647 = vmatpush.msra.mxu0 0.0
    %1648 = vmatpush.msra.mxu0 0.0
    %1649 = vmatpush.msra.mxu0 0.0
    %1650 = vmatpush.msra.mxu0 0.0
    %1651 = vmatpush.msra.mxu0 0.0
    %1652 = vmatpush.msra.mxu0 0.0
    %1653 = vmatpush.msra.mxu0 0.0
    %1654 = vmatpush.msra.mxu0 %v1640
    %1655 = vmatpush.msra.mxu0 %v1639
    %1656 = vmatpush.msra.mxu0 %v1638
    %1657 = vmatpush.msra.mxu0 %v1637
    %1658 = vmatpush.msra.mxu0 %v1636
    %1659 = vmatpush.msra.mxu0 %v1635
    %1660 = vmatpush.msra.mxu0 %v1634
    %1661 = vmatpush.msra.mxu0 %v1633
    %1662 = vmatmul.f32.gmra.mxu0 %v1644
    %v1663 = vpop.f32.mrf.mxu0
    %v1664 = vadd.f32 %v1642, %v1663
    %1665 = vdwg.mxu0
    %v1666 = vmax.f32 %v1664, 0.0
    %v1667 = vld [vmem:[#allocation5 + $0x428] sm:$0xff]
    %v1668 = vld [vmem:[#allocation5 + $0x430] sm:$0xff]
    %v1669 = vld [vmem:[#allocation5 + $0x438] sm:$0xff]
    %v1670 = vld [vmem:[#allocation5 + $0x440] sm:$0xff]
    %v1671 = vld [vmem:[#allocation5 + $0x448] sm:$0xff]
    %v1672 = vld [vmem:[#allocation5 + $0x450] sm:$0xff]
    %v1673 = vld [vmem:[#allocation5 + $0x458] sm:$0xff]
    %v1674 = vld [vmem:[#allocation5 + $0x460] sm:$0xff]
    %v1675 = vld [vmem:[#allocation5 + $0x468] sm:$0xff]
    %v1676 = vld [vmem:[#allocation5 + $0x470] sm:$0xff]
    %v1677 = vld [vmem:[#allocation5 + $0x478] sm:$0xff]
    %v1678 = vld [vmem:[#allocation5 + $0x480] sm:$0xff]
    %v1679 = vld [vmem:[#allocation5 + $0x488] sm:$0xff]
    %v1680 = vld [vmem:[#allocation5 + $0x490] sm:$0xff]
    %v1681 = vld [vmem:[#allocation5 + $0x498] sm:$0xff]
    %v1682 = vld [vmem:[#allocation5 + $0x4a0] sm:$0xff]
    %v1683 = vld [vmem:[#allocation7 + $0x17] sm:$0x1]
    %v1684 = vperm.slane %v1683, 0
    %1685 = vmatpush.msra.mxu0 %v1682
    %1686 = vmatpush.msra.mxu0 %v1681
    %1687 = vmatpush.msra.mxu0 %v1680
    %1688 = vmatpush.msra.mxu0 %v1679
    %1689 = vmatpush.msra.mxu0 %v1678
    %1690 = vmatpush.msra.mxu0 %v1677
    %1691 = vmatpush.msra.mxu0 %v1676
    %1692 = vmatpush.msra.mxu0 %v1675
    %1693 = vmatpush.msra.mxu0 %v1674
    %1694 = vmatpush.msra.mxu0 %v1673
    %1695 = vmatpush.msra.mxu0 %v1672
    %1696 = vmatpush.msra.mxu0 %v1671
    %1697 = vmatpush.msra.mxu0 %v1670
    %1698 = vmatpush.msra.mxu0 %v1669
    %1699 = vmatpush.msra.mxu0 %v1668
    %1700 = vmatpush.msra.mxu0 %v1667
    %1701 = vmatmul.f32.gmra.mxu0 %v1666
    %v1702 = vpop.f32.mrf.mxu0
    %v1703 = vadd.f32 %v1684, %v1702
    %1704 = vdwg.mxu0
    %v1705 = vadd.f32 %v1632, %v1703
    %v1706 = vld [vmem:[#allocation7 + $0x18] sm:$0x1]
    %v1707 = vld [vmem:[#allocation7 + $0x19] sm:$0x1]
    %v1708 = vsel %vm129, %v1705, 0.0
    %1709 = vadd.xlane.f32.xlu0 %v1708
    %v1710 = vpop.xlane.xlu0 %1709
    %v1711 = vmul.f32 %v1710, %v535
    %v1712 = vmul.f32 %v1705, %v1705
    %v1713 = vsel %vm129, %v1712, 0.0
    %1714 = vadd.xlane.f32.xlu0 %v1713
    %v1715 = vpop.xlane.xlu0 %1714
    %v1716 = vmul.f32 %v1715, %v535
    %v1717 = vmul.f32 %v1711, %v1711
    %v1718 = vsub.f32 %v1716, %v1717
    %v1719 = vsub.f32 %v1705, %v1711
    %v1720 = vadd.f32 %v1718, 1e-05
    %v1721 = vrsqrt.pop %v1720
    %v1722 = vmul.f32 %v1721, %v1720
    %v1723 = vmul.f32 %v1722, %v1721
    %v1724 = vmul.f32 0.5, %v1723
    %v1725 = vsub.f32 1.5, %v1724
    %v1726 = vmul.f32 %v1721, %v1725
    %vm1727 = vweird.f32 %v1720
    %vm1728 = vweird.f32 %v1721
    %vm1729 = vmor %vm1727, %vm1728
    %v1730 = vsel %vm1729, %v1721, %v1726
    %v1731 = vmul.f32 %v1719, %v1730
    %v1732 = vperm.slane %v1706, 0
    %v1733 = vmul.f32 %v1731, %v1732
    %v1734 = vperm.slane %v1707, 0
    %v1735 = vadd.f32 %v1733, %v1734
    %v1736 = vld [vmem:[#allocation7 + $0x1a] sm:$0x1]
    %v1737 = vld [vmem:[#allocation7 + $0x1b] sm:$0x1]
    %v1738 = vsel %vm129, %v1735, 0.0
    %1739 = vadd.xlane.f32.xlu0 %v1738
    %v1740 = vpop.xlane.xlu0 %1739
    %v1741 = vmul.f32 %v1740, %v535
    %v1742 = vmul.f32 %v1735, %v1735
    %v1743 = vsel %vm129, %v1742, 0.0
    %1744 = vadd.xlane.f32.xlu0 %v1743
    %v1745 = vpop.xlane.xlu0 %1744
    %v1746 = vmul.f32 %v1745, %v535
    %v1747 = vmul.f32 %v1741, %v1741
    %v1748 = vsub.f32 %v1746, %v1747
    %v1749 = vsub.f32 %v1735, %v1741
    %v1750 = vadd.f32 %v1748, 1e-05
    %v1751 = vrsqrt.pop %v1750
    %v1752 = vmul.f32 %v1751, %v1750
    %v1753 = vmul.f32 %v1752, %v1751
    %v1754 = vmul.f32 0.5, %v1753
    %v1755 = vsub.f32 1.5, %v1754
    %v1756 = vmul.f32 %v1751, %v1755
    %vm1757 = vweird.f32 %v1750
    %vm1758 = vweird.f32 %v1751
    %vm1759 = vmor %vm1757, %vm1758
    %v1760 = vsel %vm1759, %v1751, %v1756
    %v1761 = vmul.f32 %v1749, %v1760
    %v1762 = vperm.slane %v1736, 0
    %v1763 = vmul.f32 %v1761, %v1762
    %v1764 = vperm.slane %v1737, 0
    %v1765 = vadd.f32 %v1763, %v1764
    %v1766 = vld [vmem:[#allocation5 + $0x4a8] sm:$0xff]
    %v1767 = vld [vmem:[#allocation5 + $0x4b0] sm:$0xff]
    %v1768 = vld [vmem:[#allocation5 + $0x4b8] sm:$0xff]
    %v1769 = vld [vmem:[#allocation5 + $0x4c0] sm:$0xff]
    %v1770 = vld [vmem:[#allocation5 + $0x4c8] sm:$0xff]
    %v1771 = vld [vmem:[#allocation5 + $0x4d0] sm:$0xff]
    %v1772 = vld [vmem:[#allocation5 + $0x4d8] sm:$0xff]
    %v1773 = vld [vmem:[#allocation5 + $0x4e0] sm:$0xff]
    %v1774 = vld [vmem:[#allocation7 + $0x1c] sm:$0x1]
    %v1775 = vperm.slane %v1774, 0
    %v1777 = vsel %vm129, %v1765, 0
    %1779 = vmatpush.msra.mxu0 0.0
    %1780 = vmatpush.msra.mxu0 0.0
    %1781 = vmatpush.msra.mxu0 0.0
    %1782 = vmatpush.msra.mxu0 0.0
    %1783 = vmatpush.msra.mxu0 0.0
    %1784 = vmatpush.msra.mxu0 0.0
    %1785 = vmatpush.msra.mxu0 0.0
    %1786 = vmatpush.msra.mxu0 0.0
    %1787 = vmatpush.msra.mxu0 %v1773
    %1788 = vmatpush.msra.mxu0 %v1772
    %1789 = vmatpush.msra.mxu0 %v1771
    %1790 = vmatpush.msra.mxu0 %v1770
    %1791 = vmatpush.msra.mxu0 %v1769
    %1792 = vmatpush.msra.mxu0 %v1768
    %1793 = vmatpush.msra.mxu0 %v1767
    %1794 = vmatpush.msra.mxu0 %v1766
    %1795 = vmatmul.f32.gmra.mxu0 %v1777
    %v1796 = vpop.f32.mrf.mxu0
    %v1797 = vadd.f32 %v1775, %v1796
    %1798 = vdwg.mxu0
    %1799 = vst [vmem:[#allocation8] sm:$0xff] %v1797
    // Predicated region
    $region26: #{tpu_custom_call.1} parent=1 // pred_check
      _
    $region27: #{tpu_custom_call.1} parent=1 // pred_check_branch
      %1801 = sbr.rel (0) target = $region29
    $region28: #{tpu_custom_call.1} parent=1 // pred_region
      %1803 = vsyncadd [#allocation4], 0
      %s1805 = sshll.u32 [#allocation8], 4
      %s1806 = int_to_ptr.vmem [resolvable:$true] %s1805
      %s1807 = sshll.u32 %s3, 4
      %s1808 = int_to_ptr.hbm [resolvable:$true] %s1807
      %1810 = dma.vmem_to_hbm [thread:$0]  %s1806, 128, %s1808, [#allocation4]
    $region29: #{tpu_custom_call.1} parent=1 // pred_fallthru
      _
    // Predicated region
    $region30: #{tpu_custom_call.1} parent=1 // pred_check
      _
    $region31: #{tpu_custom_call.1} parent=1 // pred_check_branch
      %1812 = sbr.rel (0) target = $region33
    $region32: #{tpu_custom_call.1} parent=1 // pred_region
      %1814 = dma.done [#allocation4], 128
    $region33: #{tpu_custom_call.1} parent=1 // pred_fallthru
      _
    %1815 = vsyncpa [#allocation3], 1
    %1816 = vsyncpa [#allocation6], 1
    %1817 = vsyncpa [#allocation4], 1

</llo_original>
